<compile_context>
chip_gen: v5e
topology: v5e:2x2
jax: 0.10.0
libtpu: 0.0.40
codegen_flags: <defaults>
</compile_context>

<pallas_src>
import jax
import jax.numpy as jnp
import numpy as np
from jax.experimental import pallas as pl
from jax.experimental.pallas import tpu as pltpu


# ----------------------------- kernel ---------------------------------------
def contact_vae_kernel(
    # data
    y_ref, cond_ref, eps_ref,
    # fused (encoder + decoder) cond_encoder1
    c1_w1, c1_b1, c1_w2, c1_b2, c1_w3, c1_b3,
    # encoder.main (first-layer weight split: y part / zero-padded cond part)
    em1_wy, em1_wc, em1_b, em2_w, em2_b, em3_w, em3_b,
    # fused encoder heads fc1|fc2
    fc_w, fc_b,
    # decoder.main (first-layer weight split: z part / zero-padded cond part)
    dm1_wz, dm1_wc, dm1_b, dm2_w, dm2_b, dm3_w, dm3_b, dm4_w, dm4_b,
    # single fused output: [recon | mu | logvar]
    out_ref,
):
    f32 = jnp.float32
    y = y_ref[...]
    cond = cond_ref[...]      # == cond[:, -cond_dim:] (cond has exactly cond_dim features)
    eps = eps_ref[...]
    z_dim = eps.shape[1]

    def w(r):  # bf16 weights -> f32 (accumulate in f32 on the MXU)
        return r[...].astype(f32)

    def lin(x, w_ref, b_ref):
        return jnp.dot(x, w(w_ref), preferred_element_type=f32) + w(b_ref)

    relu = lambda v: jnp.maximum(v, 0.0)

    # ---- fused encoder.cond_encoder1 + decoder.cond_encoder1 ----
    cc = relu(lin(cond, c1_w1, c1_b1))
    cc = relu(lin(cc, c1_w2, c1_b2))
    cc = lin(cc, c1_w3, c1_b3)            # (tb, 128) = [enc_cond1 | dec_cond1]

    # ---- encoder.main on cat(y, enc_cond1) (em1_wc zero-padded on the dec half) ----
    x = relu(jnp.dot(y, w(em1_wy), preferred_element_type=f32)
             + jnp.dot(cc, w(em1_wc), preferred_element_type=f32)
             + w(em1_b))
    x = relu(lin(x, em2_w, em2_b))
    x = lin(x, em3_w, em3_b)

    # ---- fused heads: one matmul -> [mu | logvar] ----
    ml = lin(x, fc_w, fc_b)               # (tb, 2*z_dim)
    mu = ml[:, :z_dim]
    logvar = ml[:, z_dim:]

    # ---- reparameterize (eps supplied deterministically by the wrapper) ----
    z = mu + eps * jnp.exp(0.5 * logvar)

    # ---- decoder.main on cat(z, dec_cond1) (dm1_wc zero-padded on the enc half) ----
    d = relu(jnp.dot(z, w(dm1_wz), preferred_element_type=f32)
             + jnp.dot(cc, w(dm1_wc), preferred_element_type=f32)
             + w(dm1_b))
    d = relu(lin(d, dm2_w, dm2_b))
    d = relu(lin(d, dm3_w, dm3_b))
    recon = lin(d, dm4_w, dm4_b)

    # single lane-dense store of all outputs
    out_ref[...] = jnp.concatenate([recon, ml], axis=-1)


# ----------------------------- wrapper ---------------------------------------
def _round_up(n, m):
    return ((n + m - 1) // m) * m


def _choose_tb(batch):
    # Big tiles amortize the per-grid-step pipeline overhead; keep >= 2 grid
    # steps when the batch allows so the 'parallel' axis can shard across both
    # TensorCores on v7x.  Cap at 1024 rows (activations stay well under VMEM).
    half = _round_up(max(batch // 2, 1), 8)
    return int(min(1024, max(8, half)))


def contact_vae_forward(y, cond, eps, packed_params, *, tb=None):
    """packed_params: list produced by pack_params() (fused, bf16)."""
    B, input_dim = y.shape
    _, cond_dim = cond.shape
    _, z_dim = eps.shape
    out_dim = input_dim + 2 * z_dim

    if tb is None:
        tb = _choose_tb(B)
    n_blocks = pl.cdiv(B, tb)
    b_pad = n_blocks * tb
    if b_pad != B:
        pad = ((0, b_pad - B), (0, 0))
        y = jnp.pad(y, pad)
        cond = jnp.pad(cond, pad)
        eps = jnp.pad(eps, pad)

    def batch_spec(feat):
        return pl.BlockSpec((tb, feat), lambda i: (i, 0))

    def full_spec(arr):
        # Constant index_map -> weights stay resident in VMEM across the grid.
        return pl.BlockSpec(arr.shape, lambda i: (0, 0))

    in_specs = [batch_spec(input_dim), batch_spec(cond_dim), batch_spec(z_dim)]
    in_specs += [full_spec(p) for p in packed_params]

    out = pl.pallas_call(
        contact_vae_kernel,
        out_shape=jax.ShapeDtypeStruct((b_pad, out_dim), jnp.float32),
        grid_spec=pltpu.PrefetchScalarGridSpec(
            num_scalar_prefetch=0,
            grid=(n_blocks,),
            in_specs=in_specs,
            out_specs=batch_spec(out_dim),
        ),
        compiler_params=pltpu.CompilerParams(
            dimension_semantics=("parallel",)),
    )(y, cond, eps, *packed_params)

    out = out[:B]
    recon = out[:, :input_dim]
    mu = out[:, input_dim:input_dim + z_dim]
    logvar = out[:, input_dim + z_dim:]
    return recon, mu, logvar


# ----------------------------- param packing ---------------------------------
def _block_diag(a, b):
    ra, ca = a.shape
    rb, cb = b.shape
    top = jnp.concatenate([a, jnp.zeros((ra, cb), a.dtype)], axis=1)
    bot = jnp.concatenate([jnp.zeros((rb, ca), b.dtype), b], axis=1)
    return jnp.concatenate([top, bot], axis=0)


def pack_params(p, *, dtype=jnp.bfloat16):
    """Fuse the original (pre-transposed) parameters into the kernel layout."""
    (ec1_w1, ec1_b1, ec1_w2, ec1_b2, ec1_w3, ec1_b3,
     em1_wy, em1_wc, em1_b1, em2_w, em2_b, em3_w, em3_b,
     fc1_w, fc1_b, fc2_w, fc2_b,
     dc1_w1, dc1_b1, dc1_w2, dc1_b2, dc1_w3, dc1_b3,
     dm1_wz, dm1_wc, dm1_b1, dm2_w, dm2_b, dm3_w, dm3_b, dm4_w, dm4_b) = p

    # fused cond_encoder1 (encoder || decoder): layer1 concat on N, layers 2/3 block-diag.
    c1_w1 = jnp.concatenate([ec1_w1, dc1_w1], axis=1)
    c1_b1 = jnp.concatenate([ec1_b1, dc1_b1], axis=1)
    c1_w2 = _block_diag(ec1_w2, dc1_w2)
    c1_b2 = jnp.concatenate([ec1_b2, dc1_b2], axis=1)
    c1_w3 = _block_diag(ec1_w3, dc1_w3)
    c1_b3 = jnp.concatenate([ec1_b3, dc1_b3], axis=1)     # (1, 128)

    # zero-pad the cond halves of the first main layers so the fused 128-wide
    # cond1 activation can be consumed without lane slicing.
    zc_e = jnp.zeros((dm1_wc.shape[0], em1_wc.shape[1]), em1_wc.dtype)
    em1_wc_pad = jnp.concatenate([em1_wc, zc_e], axis=0)  # (128, 32)
    zc_d = jnp.zeros((em1_wc.shape[0], dm1_wc.shape[1]), dm1_wc.dtype)
    dm1_wc_pad = jnp.concatenate([zc_d, dm1_wc], axis=0)  # (128, 32)

    # fused encoder heads.
    fc_w = jnp.concatenate([fc1_w, fc2_w], axis=1)        # (16, 2*z_dim)
    fc_b = jnp.concatenate([fc1_b, fc2_b], axis=1)

    packed = [c1_w1, c1_b1, c1_w2, c1_b2, c1_w3, c1_b3,
              em1_wy, em1_wc_pad, em1_b1, em2_w, em2_b, em3_w, em3_b,
              fc_w, fc_b,
              dm1_wz, dm1_wc_pad, dm1_b1, dm2_w, dm2_b, dm3_w, dm3_b, dm4_w, dm4_b]
    return [q.astype(dtype) for q in packed]


# ----------------------------- param init ------------------------------------
def init_params(key, *, input_dim, cond_dim, h_dim, z_dim):
    """Deterministic synthetic init mimicking PyTorch Linear U(-1/sqrt(fan_in), .)."""
    shapes = [
        # encoder.cond_encoder1
        ("ec1_w1", (cond_dim, h_dim)), ("ec1_b1", (1, h_dim)),
        ("ec1_w2", (h_dim, h_dim)),    ("ec1_b2", (1, h_dim)),
        ("ec1_w3", (h_dim, 64)),       ("ec1_b3", (1, 64)),
        # encoder.main (first layer split: rows [:input_dim] / [input_dim:])
        ("em1_wy", (input_dim, 32)), ("em1_wc", (64, 32)), ("em1_b1", (1, 32)),
        ("em2_w", (32, 32)), ("em2_b", (1, 32)),
        ("em3_w", (32, 16)), ("em3_b", (1, 16)),
        # encoder heads
        ("fc1_w", (16, z_dim)), ("fc1_b", (1, z_dim)),
        ("fc2_w", (16, z_dim)), ("fc2_b", (1, z_dim)),
        # decoder.cond_encoder1
        ("dc1_w1", (cond_dim, h_dim)), ("dc1_b1", (1, h_dim)),
        ("dc1_w2", (h_dim, h_dim)),    ("dc1_b2", (1, h_dim)),
        ("dc1_w3", (h_dim, 64)),       ("dc1_b3", (1, 64)),
        # decoder.main (first layer split: rows [:z_dim] / [z_dim:])
        ("dm1_wz", (z_dim, 32)), ("dm1_wc", (64, 32)), ("dm1_b1", (1, 32)),
        ("dm2_w", (32, 32)), ("dm2_b", (1, 32)),
        ("dm3_w", (32, 16)), ("dm3_b", (1, 16)),
        ("dm4_w", (16, input_dim)), ("dm4_b", (1, input_dim)),
    ]
    params = []
    for _name, shape in shapes:
        key, sub = jax.random.split(key)
        fan_in = shape[0] if shape[0] > 1 else shape[1]
        bound = 1.0 / np.sqrt(fan_in)
        params.append(jax.random.uniform(sub, shape, jnp.float32, -bound, bound))
    return params


# ----------------------------- reference (pure JAX, original layout) ----------
def reference_forward(y, cond, eps, params):
    (ec1_w1, ec1_b1, ec1_w2, ec1_b2, ec1_w3, ec1_b3,
     em1_wy, em1_wc, em1_b1, em2_w, em2_b, em3_w, em3_b,
     fc1_w, fc1_b, fc2_w, fc2_b,
     dc1_w1, dc1_b1, dc1_w2, dc1_b2, dc1_w3, dc1_b3,
     dm1_wz, dm1_wc, dm1_b1, dm2_w, dm2_b, dm3_w, dm3_b, dm4_w, dm4_b) = params

    relu = lambda v: jnp.maximum(v, 0.0)
    h = relu(cond @ ec1_w1 + ec1_b1)
    h = relu(h @ ec1_w2 + ec1_b2)
    cond1 = h @ ec1_w3 + ec1_b3
    x = relu(jnp.concatenate([y, cond1], -1)
             @ jnp.concatenate([em1_wy, em1_wc], 0) + em1_b1)
    x = relu(x @ em2_w + em2_b)
    x = x @ em3_w + em3_b
    mu = x @ fc1_w + fc1_b
    logvar = x @ fc2_w + fc2_b
    z = mu + eps * jnp.exp(0.5 * logvar)
    h = relu(cond @ dc1_w1 + dc1_b1)
    h = relu(h @ dc1_w2 + dc1_b2)
    dcond1 = h @ dc1_w3 + dc1_b3
    d = relu(jnp.concatenate([z, dcond1], -1)
             @ jnp.concatenate([dm1_wz, dm1_wc], 0) + dm1_b1)
    d = relu(d @ dm2_w + dm2_b)
    d = relu(d @ dm3_w + dm3_b)
    recon = d @ dm4_w + dm4_b
    return recon, mu, logvar


# ----------------------------- main -------------------------------------------
if __name__ == "__main__":
    # Small, VAE-consistent dims.
    input_dim_goalnet = 16   # "y" / reconstruction dim
    interaction_dim = 32     # cond_dim
    pose_dim = 8             # unused by forward
    h_dim_goalnet = 32
    z_dim_goalnet = 8
    batch = 32               # -> tb=16, grid=2 (both TCs on v7x)

    key = jax.random.PRNGKey(0)
    k_y, k_c, k_eps, k_p = jax.random.split(key, 4)

    y = jax.random.normal(k_y, (batch, input_dim_goalnet), jnp.float32)
    cond = jax.random.normal(k_c, (batch, interaction_dim), jnp.float32)
    # deterministic stand-in for torch.randn_like(std) in reparameterize()
    eps = jax.random.normal(k_eps, (batch, z_dim_goalnet), jnp.float32)

    params_f32 = init_params(
        k_p,
        input_dim=input_dim_goalnet,
        cond_dim=interaction_dim,
        h_dim=h_dim_goalnet,
        z_dim=z_dim_goalnet,
    )
    # bf16-round once; both the kernel (packed bf16) and the reference (f32 view of
    # the same rounded values) use identical weights -> apples-to-apples check.
    params_bf16 = [p.astype(jnp.bfloat16) for p in params_f32]
    params_ref = [p.astype(jnp.float32) for p in params_bf16]
    packed = pack_params(params_bf16, dtype=jnp.bfloat16)

    recon, mu, logvar = contact_vae_forward(y, cond, eps, packed)
    jax.block_until_ready((recon, mu, logvar))

    # Correctness check against a pure-JAX reference of the original module math.
    r_ref, mu_ref, lv_ref = reference_forward(y, cond, eps, params_ref)
    np.testing.assert_allclose(np.asarray(recon), np.asarray(r_ref), rtol=1e-4, atol=1e-4)
    np.testing.assert_allclose(np.asarray(mu), np.asarray(mu_ref), rtol=1e-4, atol=1e-4)
    np.testing.assert_allclose(np.asarray(logvar), np.asarray(lv_ref), rtol=1e-4, atol=1e-4)

    print("KERNEL_OK")
</pallas_src>

<mosaic_0001>
module attributes {stable_mosaic.version = 11 : i64} {
  func.func @contact_vae_kernel(%arg0: i32, %arg1: memref<16x16xf32, #tpu.memory_space<vmem>>, %arg2: memref<16x32xf32, #tpu.memory_space<vmem>>, %arg3: memref<16x8xf32, #tpu.memory_space<vmem>>, %arg4: memref<32x64xbf16, #tpu.memory_space<vmem>>, %arg5: memref<1x64xbf16, #tpu.memory_space<vmem>>, %arg6: memref<64x64xbf16, #tpu.memory_space<vmem>>, %arg7: memref<1x64xbf16, #tpu.memory_space<vmem>>, %arg8: memref<64x128xbf16, #tpu.memory_space<vmem>>, %arg9: memref<1x128xbf16, #tpu.memory_space<vmem>>, %arg10: memref<16x32xbf16, #tpu.memory_space<vmem>>, %arg11: memref<128x32xbf16, #tpu.memory_space<vmem>>, %arg12: memref<1x32xbf16, #tpu.memory_space<vmem>>, %arg13: memref<32x32xbf16, #tpu.memory_space<vmem>>, %arg14: memref<1x32xbf16, #tpu.memory_space<vmem>>, %arg15: memref<32x16xbf16, #tpu.memory_space<vmem>>, %arg16: memref<1x16xbf16, #tpu.memory_space<vmem>>, %arg17: memref<16x16xbf16, #tpu.memory_space<vmem>>, %arg18: memref<1x16xbf16, #tpu.memory_space<vmem>>, %arg19: memref<8x32xbf16, #tpu.memory_space<vmem>>, %arg20: memref<128x32xbf16, #tpu.memory_space<vmem>>, %arg21: memref<1x32xbf16, #tpu.memory_space<vmem>>, %arg22: memref<32x32xbf16, #tpu.memory_space<vmem>>, %arg23: memref<1x32xbf16, #tpu.memory_space<vmem>>, %arg24: memref<32x16xbf16, #tpu.memory_space<vmem>>, %arg25: memref<1x16xbf16, #tpu.memory_space<vmem>>, %arg26: memref<16x16xbf16, #tpu.memory_space<vmem>>, %arg27: memref<1x16xbf16, #tpu.memory_space<vmem>>, %arg28: memref<16x32xf32, #tpu.memory_space<vmem>>) attributes {dimension_semantics = [#tpu.dimension_semantics<parallel>], iteration_bounds = array<i64: 2>, scalar_prefetch = 0 : i64, scratch_operands = 0 : i64, tpu.core_type = #tpu.core_type<tc>, window_params = [{transform_indices = @transform_0, window_bounds = array<i64: 16, 16>}, {transform_indices = @transform_1, window_bounds = array<i64: 16, 32>}, {transform_indices = @transform_2, window_bounds = array<i64: 16, 8>}, {pipeline_mode = #tpu.pipeline_mode<synchronous>, transform_indices = @transform_3, window_bounds = array<i64: 32, 64>}, {pipeline_mode = #tpu.pipeline_mode<synchronous>, transform_indices = @transform_4, window_bounds = array<i64: 1, 64>}, {pipeline_mode = #tpu.pipeline_mode<synchronous>, transform_indices = @transform_5, window_bounds = array<i64: 64, 64>}, {pipeline_mode = #tpu.pipeline_mode<synchronous>, transform_indices = @transform_6, window_bounds = array<i64: 1, 64>}, {pipeline_mode = #tpu.pipeline_mode<synchronous>, transform_indices = @transform_7, window_bounds = array<i64: 64, 128>}, {pipeline_mode = #tpu.pipeline_mode<synchronous>, transform_indices = @transform_8, window_bounds = array<i64: 1, 128>}, {pipeline_mode = #tpu.pipeline_mode<synchronous>, transform_indices = @transform_9, window_bounds = array<i64: 16, 32>}, {pipeline_mode = #tpu.pipeline_mode<synchronous>, transform_indices = @transform_10, window_bounds = array<i64: 128, 32>}, {pipeline_mode = #tpu.pipeline_mode<synchronous>, transform_indices = @transform_11, window_bounds = array<i64: 1, 32>}, {pipeline_mode = #tpu.pipeline_mode<synchronous>, transform_indices = @transform_12, window_bounds = array<i64: 32, 32>}, {pipeline_mode = #tpu.pipeline_mode<synchronous>, transform_indices = @transform_13, window_bounds = array<i64: 1, 32>}, {pipeline_mode = #tpu.pipeline_mode<synchronous>, transform_indices = @transform_14, window_bounds = array<i64: 32, 16>}, {pipeline_mode = #tpu.pipeline_mode<synchronous>, transform_indices = @transform_15, window_bounds = array<i64: 1, 16>}, {pipeline_mode = #tpu.pipeline_mode<synchronous>, transform_indices = @transform_16, window_bounds = array<i64: 16, 16>}, {pipeline_mode = #tpu.pipeline_mode<synchronous>, transform_indices = @transform_17, window_bounds = array<i64: 1, 16>}, {pipeline_mode = #tpu.pipeline_mode<synchronous>, transform_indices = @transform_18, window_bounds = array<i64: 8, 32>}, {pipeline_mode = #tpu.pipeline_mode<synchronous>, transform_indices = @transform_19, window_bounds = array<i64: 128, 32>}, {pipeline_mode = #tpu.pipeline_mode<synchronous>, transform_indices = @transform_20, window_bounds = array<i64: 1, 32>}, {pipeline_mode = #tpu.pipeline_mode<synchronous>, transform_indices = @transform_21, window_bounds = array<i64: 32, 32>}, {pipeline_mode = #tpu.pipeline_mode<synchronous>, transform_indices = @transform_22, window_bounds = array<i64: 1, 32>}, {pipeline_mode = #tpu.pipeline_mode<synchronous>, transform_indices = @transform_23, window_bounds = array<i64: 32, 16>}, {pipeline_mode = #tpu.pipeline_mode<synchronous>, transform_indices = @transform_24, window_bounds = array<i64: 1, 16>}, {pipeline_mode = #tpu.pipeline_mode<synchronous>, transform_indices = @transform_25, window_bounds = array<i64: 16, 16>}, {pipeline_mode = #tpu.pipeline_mode<synchronous>, transform_indices = @transform_26, window_bounds = array<i64: 1, 16>}, {transform_indices = @transform_27, window_bounds = array<i64: 16, 32>}]} {
    %c0 = arith.constant 0 : index
    %c0_0 = arith.constant 0 : index
    %0 = vector.load %arg1[%c0, %c0_0] : memref<16x16xf32, #tpu.memory_space<vmem>>, vector<16x16xf32>
    %c0_1 = arith.constant 0 : index
    %c0_2 = arith.constant 0 : index
    %1 = vector.load %arg2[%c0_1, %c0_2] : memref<16x32xf32, #tpu.memory_space<vmem>>, vector<16x32xf32>
    %c0_3 = arith.constant 0 : index
    %c0_4 = arith.constant 0 : index
    %2 = vector.load %arg3[%c0_3, %c0_4] : memref<16x8xf32, #tpu.memory_space<vmem>>, vector<16x8xf32>
    %c0_5 = arith.constant 0 : index
    %c0_6 = arith.constant 0 : index
    %3 = vector.load %arg4[%c0_5, %c0_6] : memref<32x64xbf16, #tpu.memory_space<vmem>>, vector<32x64xbf16>
    %4 = arith.extf %3 : vector<32x64xbf16> to vector<32x64xf32>
    %cst = arith.constant dense<0.000000e+00> : vector<16x64xf32>
    %5 = tpu.matmul %1, %4, %cst {dimension_numbers = #tpu.dot_dimension_numbers<[1], [0], [0], [1], [0, 0, 1, 1], [], []>} : vector<16x32xf32>, vector<32x64xf32>, vector<16x64xf32> -> vector<16x64xf32>
    %c0_7 = arith.constant 0 : index
    %c0_8 = arith.constant 0 : index
    %6 = vector.load %arg5[%c0_7, %c0_8] : memref<1x64xbf16, #tpu.memory_space<vmem>>, vector<1x64xbf16>
    %7 = arith.extf %6 : vector<1x64xbf16> to vector<1x64xf32>
    %8 = vector.broadcast %7 : vector<1x64xf32> to vector<16x64xf32>
    %9 = arith.addf %5, %8 : vector<16x64xf32>
    %cst_9 = arith.constant 0.000000e+00 : f32
    %10 = vector.broadcast %cst_9 : f32 to vector<16x64xf32>
    %11 = arith.maximumf %9, %10 : vector<16x64xf32>
    %c0_10 = arith.constant 0 : index
    %c0_11 = arith.constant 0 : index
    %12 = vector.load %arg6[%c0_10, %c0_11] : memref<64x64xbf16, #tpu.memory_space<vmem>>, vector<64x64xbf16>
    %13 = arith.extf %12 : vector<64x64xbf16> to vector<64x64xf32>
    %cst_12 = arith.constant dense<0.000000e+00> : vector<16x64xf32>
    %14 = tpu.matmul %11, %13, %cst_12 {dimension_numbers = #tpu.dot_dimension_numbers<[1], [0], [0], [1], [0, 0, 1, 1], [], []>} : vector<16x64xf32>, vector<64x64xf32>, vector<16x64xf32> -> vector<16x64xf32>
    %c0_13 = arith.constant 0 : index
    %c0_14 = arith.constant 0 : index
    %15 = vector.load %arg7[%c0_13, %c0_14] : memref<1x64xbf16, #tpu.memory_space<vmem>>, vector<1x64xbf16>
    %16 = arith.extf %15 : vector<1x64xbf16> to vector<1x64xf32>
    %17 = vector.broadcast %16 : vector<1x64xf32> to vector<16x64xf32>
    %18 = arith.addf %14, %17 : vector<16x64xf32>
    %cst_15 = arith.constant 0.000000e+00 : f32
    %19 = vector.broadcast %cst_15 : f32 to vector<16x64xf32>
    %20 = arith.maximumf %18, %19 : vector<16x64xf32>
    %c0_16 = arith.constant 0 : index
    %c0_17 = arith.constant 0 : index
    %21 = vector.load %arg8[%c0_16, %c0_17] : memref<64x128xbf16, #tpu.memory_space<vmem>>, vector<64x128xbf16>
    %22 = arith.extf %21 : vector<64x128xbf16> to vector<64x128xf32>
    %cst_18 = arith.constant dense<0.000000e+00> : vector<16x128xf32>
    %23 = tpu.matmul %20, %22, %cst_18 {dimension_numbers = #tpu.dot_dimension_numbers<[1], [0], [0], [1], [0, 0, 1, 1], [], []>} : vector<16x64xf32>, vector<64x128xf32>, vector<16x128xf32> -> vector<16x128xf32>
    %c0_19 = arith.constant 0 : index
    %c0_20 = arith.constant 0 : index
    %24 = vector.load %arg9[%c0_19, %c0_20] : memref<1x128xbf16, #tpu.memory_space<vmem>>, vector<1x128xbf16>
    %25 = arith.extf %24 : vector<1x128xbf16> to vector<1x128xf32>
    %26 = vector.broadcast %25 : vector<1x128xf32> to vector<16x128xf32>
    %27 = arith.addf %23, %26 : vector<16x128xf32>
    %c0_21 = arith.constant 0 : index
    %c0_22 = arith.constant 0 : index
    %28 = vector.load %arg10[%c0_21, %c0_22] : memref<16x32xbf16, #tpu.memory_space<vmem>>, vector<16x32xbf16>
    %29 = arith.extf %28 : vector<16x32xbf16> to vector<16x32xf32>
    %cst_23 = arith.constant dense<0.000000e+00> : vector<16x32xf32>
    %30 = tpu.matmul %0, %29, %cst_23 {dimension_numbers = #tpu.dot_dimension_numbers<[1], [0], [0], [1], [0, 0, 1, 1], [], []>} : vector<16x16xf32>, vector<16x32xf32>, vector<16x32xf32> -> vector<16x32xf32>
    %c0_24 = arith.constant 0 : index
    %c0_25 = arith.constant 0 : index
    %31 = vector.load %arg11[%c0_24, %c0_25] : memref<128x32xbf16, #tpu.memory_space<vmem>>, vector<128x32xbf16>
    %32 = arith.extf %31 : vector<128x32xbf16> to vector<128x32xf32>
    %cst_26 = arith.constant dense<0.000000e+00> : vector<16x32xf32>
    %33 = tpu.matmul %27, %32, %cst_26 {dimension_numbers = #tpu.dot_dimension_numbers<[1], [0], [0], [1], [0, 0, 1, 1], [], []>} : vector<16x128xf32>, vector<128x32xf32>, vector<16x32xf32> -> vector<16x32xf32>
    %34 = arith.addf %30, %33 : vector<16x32xf32>
    %c0_27 = arith.constant 0 : index
    %c0_28 = arith.constant 0 : index
    %35 = vector.load %arg12[%c0_27, %c0_28] : memref<1x32xbf16, #tpu.memory_space<vmem>>, vector<1x32xbf16>
    %36 = arith.extf %35 : vector<1x32xbf16> to vector<1x32xf32>
    %37 = vector.broadcast %36 : vector<1x32xf32> to vector<16x32xf32>
    %38 = arith.addf %34, %37 : vector<16x32xf32>
    %cst_29 = arith.constant 0.000000e+00 : f32
    %39 = vector.broadcast %cst_29 : f32 to vector<16x32xf32>
    %40 = arith.maximumf %38, %39 : vector<16x32xf32>
    %c0_30 = arith.constant 0 : index
    %c0_31 = arith.constant 0 : index
    %41 = vector.load %arg13[%c0_30, %c0_31] : memref<32x32xbf16, #tpu.memory_space<vmem>>, vector<32x32xbf16>
    %42 = arith.extf %41 : vector<32x32xbf16> to vector<32x32xf32>
    %cst_32 = arith.constant dense<0.000000e+00> : vector<16x32xf32>
    %43 = tpu.matmul %40, %42, %cst_32 {dimension_numbers = #tpu.dot_dimension_numbers<[1], [0], [0], [1], [0, 0, 1, 1], [], []>} : vector<16x32xf32>, vector<32x32xf32>, vector<16x32xf32> -> vector<16x32xf32>
    %c0_33 = arith.constant 0 : index
    %c0_34 = arith.constant 0 : index
    %44 = vector.load %arg14[%c0_33, %c0_34] : memref<1x32xbf16, #tpu.memory_space<vmem>>, vector<1x32xbf16>
    %45 = arith.extf %44 : vector<1x32xbf16> to vector<1x32xf32>
    %46 = vector.broadcast %45 : vector<1x32xf32> to vector<16x32xf32>
    %47 = arith.addf %43, %46 : vector<16x32xf32>
    %cst_35 = arith.constant 0.000000e+00 : f32
    %48 = vector.broadcast %cst_35 : f32 to vector<16x32xf32>
    %49 = arith.maximumf %47, %48 : vector<16x32xf32>
    %c0_36 = arith.constant 0 : index
    %c0_37 = arith.constant 0 : index
    %50 = vector.load %arg15[%c0_36, %c0_37] : memref<32x16xbf16, #tpu.memory_space<vmem>>, vector<32x16xbf16>
    %51 = arith.extf %50 : vector<32x16xbf16> to vector<32x16xf32>
    %cst_38 = arith.constant dense<0.000000e+00> : vector<16x16xf32>
    %52 = tpu.matmul %49, %51, %cst_38 {dimension_numbers = #tpu.dot_dimension_numbers<[1], [0], [0], [1], [0, 0, 1, 1], [], []>} : vector<16x32xf32>, vector<32x16xf32>, vector<16x16xf32> -> vector<16x16xf32>
    %c0_39 = arith.constant 0 : index
    %c0_40 = arith.constant 0 : index
    %53 = vector.load %arg16[%c0_39, %c0_40] : memref<1x16xbf16, #tpu.memory_space<vmem>>, vector<1x16xbf16>
    %54 = arith.extf %53 : vector<1x16xbf16> to vector<1x16xf32>
    %55 = vector.broadcast %54 : vector<1x16xf32> to vector<16x16xf32>
    %56 = arith.addf %52, %55 : vector<16x16xf32>
    %c0_41 = arith.constant 0 : index
    %c0_42 = arith.constant 0 : index
    %57 = vector.load %arg17[%c0_41, %c0_42] : memref<16x16xbf16, #tpu.memory_space<vmem>>, vector<16x16xbf16>
    %58 = arith.extf %57 : vector<16x16xbf16> to vector<16x16xf32>
    %cst_43 = arith.constant dense<0.000000e+00> : vector<16x16xf32>
    %59 = tpu.matmul %56, %58, %cst_43 {dimension_numbers = #tpu.dot_dimension_numbers<[1], [0], [0], [1], [0, 0, 1, 1], [], []>} : vector<16x16xf32>, vector<16x16xf32>, vector<16x16xf32> -> vector<16x16xf32>
    %c0_44 = arith.constant 0 : index
    %c0_45 = arith.constant 0 : index
    %60 = vector.load %arg18[%c0_44, %c0_45] : memref<1x16xbf16, #tpu.memory_space<vmem>>, vector<1x16xbf16>
    %61 = arith.extf %60 : vector<1x16xbf16> to vector<1x16xf32>
    %62 = vector.broadcast %61 : vector<1x16xf32> to vector<16x16xf32>
    %63 = arith.addf %59, %62 : vector<16x16xf32>
    %64 = vector.extract_strided_slice %63 {offsets = [0, 0], sizes = [16, 8], strides = [1, 1]} : vector<16x16xf32> to vector<16x8xf32>
    %65 = vector.extract_strided_slice %63 {offsets = [0, 8], sizes = [16, 8], strides = [1, 1]} : vector<16x16xf32> to vector<16x8xf32>
    %cst_46 = arith.constant 5.000000e-01 : f32
    %66 = vector.broadcast %cst_46 : f32 to vector<16x8xf32>
    %67 = arith.mulf %66, %65 : vector<16x8xf32>
    %68 = math.exp %67 : vector<16x8xf32>
    %69 = arith.mulf %2, %68 : vector<16x8xf32>
    %70 = arith.addf %64, %69 : vector<16x8xf32>
    %c0_47 = arith.constant 0 : index
    %c0_48 = arith.constant 0 : index
    %71 = vector.load %arg19[%c0_47, %c0_48] : memref<8x32xbf16, #tpu.memory_space<vmem>>, vector<8x32xbf16>
    %72 = arith.extf %71 : vector<8x32xbf16> to vector<8x32xf32>
    %cst_49 = arith.constant dense<0.000000e+00> : vector<16x32xf32>
    %73 = tpu.matmul %70, %72, %cst_49 {dimension_numbers = #tpu.dot_dimension_numbers<[1], [0], [0], [1], [0, 0, 1, 1], [], []>} : vector<16x8xf32>, vector<8x32xf32>, vector<16x32xf32> -> vector<16x32xf32>
    %c0_50 = arith.constant 0 : index
    %c0_51 = arith.constant 0 : index
    %74 = vector.load %arg20[%c0_50, %c0_51] : memref<128x32xbf16, #tpu.memory_space<vmem>>, vector<128x32xbf16>
    %75 = arith.extf %74 : vector<128x32xbf16> to vector<128x32xf32>
    %cst_52 = arith.constant dense<0.000000e+00> : vector<16x32xf32>
    %76 = tpu.matmul %27, %75, %cst_52 {dimension_numbers = #tpu.dot_dimension_numbers<[1], [0], [0], [1], [0, 0, 1, 1], [], []>} : vector<16x128xf32>, vector<128x32xf32>, vector<16x32xf32> -> vector<16x32xf32>
    %77 = arith.addf %73, %76 : vector<16x32xf32>
    %c0_53 = arith.constant 0 : index
    %c0_54 = arith.constant 0 : index
    %78 = vector.load %arg21[%c0_53, %c0_54] : memref<1x32xbf16, #tpu.memory_space<vmem>>, vector<1x32xbf16>
    %79 = arith.extf %78 : vector<1x32xbf16> to vector<1x32xf32>
    %80 = vector.broadcast %79 : vector<1x32xf32> to vector<16x32xf32>
    %81 = arith.addf %77, %80 : vector<16x32xf32>
    %cst_55 = arith.constant 0.000000e+00 : f32
    %82 = vector.broadcast %cst_55 : f32 to vector<16x32xf32>
    %83 = arith.maximumf %81, %82 : vector<16x32xf32>
    %c0_56 = arith.constant 0 : index
    %c0_57 = arith.constant 0 : index
    %84 = vector.load %arg22[%c0_56, %c0_57] : memref<32x32xbf16, #tpu.memory_space<vmem>>, vector<32x32xbf16>
    %85 = arith.extf %84 : vector<32x32xbf16> to vector<32x32xf32>
    %cst_58 = arith.constant dense<0.000000e+00> : vector<16x32xf32>
    %86 = tpu.matmul %83, %85, %cst_58 {dimension_numbers = #tpu.dot_dimension_numbers<[1], [0], [0], [1], [0, 0, 1, 1], [], []>} : vector<16x32xf32>, vector<32x32xf32>, vector<16x32xf32> -> vector<16x32xf32>
    %c0_59 = arith.constant 0 : index
    %c0_60 = arith.constant 0 : index
    %87 = vector.load %arg23[%c0_59, %c0_60] : memref<1x32xbf16, #tpu.memory_space<vmem>>, vector<1x32xbf16>
    %88 = arith.extf %87 : vector<1x32xbf16> to vector<1x32xf32>
    %89 = vector.broadcast %88 : vector<1x32xf32> to vector<16x32xf32>
    %90 = arith.addf %86, %89 : vector<16x32xf32>
    %cst_61 = arith.constant 0.000000e+00 : f32
    %91 = vector.broadcast %cst_61 : f32 to vector<16x32xf32>
    %92 = arith.maximumf %90, %91 : vector<16x32xf32>
    %c0_62 = arith.constant 0 : index
    %c0_63 = arith.constant 0 : index
    %93 = vector.load %arg24[%c0_62, %c0_63] : memref<32x16xbf16, #tpu.memory_space<vmem>>, vector<32x16xbf16>
    %94 = arith.extf %93 : vector<32x16xbf16> to vector<32x16xf32>
    %cst_64 = arith.constant dense<0.000000e+00> : vector<16x16xf32>
    %95 = tpu.matmul %92, %94, %cst_64 {dimension_numbers = #tpu.dot_dimension_numbers<[1], [0], [0], [1], [0, 0, 1, 1], [], []>} : vector<16x32xf32>, vector<32x16xf32>, vector<16x16xf32> -> vector<16x16xf32>
    %c0_65 = arith.constant 0 : index
    %c0_66 = arith.constant 0 : index
    %96 = vector.load %arg25[%c0_65, %c0_66] : memref<1x16xbf16, #tpu.memory_space<vmem>>, vector<1x16xbf16>
    %97 = arith.extf %96 : vector<1x16xbf16> to vector<1x16xf32>
    %98 = vector.broadcast %97 : vector<1x16xf32> to vector<16x16xf32>
    %99 = arith.addf %95, %98 : vector<16x16xf32>
    %cst_67 = arith.constant 0.000000e+00 : f32
    %100 = vector.broadcast %cst_67 : f32 to vector<16x16xf32>
    %101 = arith.maximumf %99, %100 : vector<16x16xf32>
    %c0_68 = arith.constant 0 : index
    %c0_69 = arith.constant 0 : index
    %102 = vector.load %arg26[%c0_68, %c0_69] : memref<16x16xbf16, #tpu.memory_space<vmem>>, vector<16x16xbf16>
    %103 = arith.extf %102 : vector<16x16xbf16> to vector<16x16xf32>
    %cst_70 = arith.constant dense<0.000000e+00> : vector<16x16xf32>
    %104 = tpu.matmul %101, %103, %cst_70 {dimension_numbers = #tpu.dot_dimension_numbers<[1], [0], [0], [1], [0, 0, 1, 1], [], []>} : vector<16x16xf32>, vector<16x16xf32>, vector<16x16xf32> -> vector<16x16xf32>
    %c0_71 = arith.constant 0 : index
    %c0_72 = arith.constant 0 : index
    %105 = vector.load %arg27[%c0_71, %c0_72] : memref<1x16xbf16, #tpu.memory_space<vmem>>, vector<1x16xbf16>
    %106 = arith.extf %105 : vector<1x16xbf16> to vector<1x16xf32>
    %107 = vector.broadcast %106 : vector<1x16xf32> to vector<16x16xf32>
    %108 = arith.addf %104, %107 : vector<16x16xf32>
    %109 = tpu.concatenate %108, %63 in 1 : vector<16x16xf32>, vector<16x16xf32> -> vector<16x32xf32>
    %c0_73 = arith.constant 0 : index
    %c0_74 = arith.constant 0 : index
    %110 = vector.load %arg28[%c0_73, %c0_74] : memref<16x32xf32, #tpu.memory_space<vmem>>, vector<16x32xf32>
    tpu.vector_store %arg28[%c0_73, %c0_74], %109 {strides = array<i32>} : memref<16x32xf32, #tpu.memory_space<vmem>>, vector<16x32xf32>,
    return
  }
  func.func @transform_0(%arg0: i32) -> (i32, i32) {
    %c0_i32 = arith.constant 0 : i32
    %c0_i32_0 = arith.constant 0 : i32
    return %arg0, %c0_i32 : i32, i32
  }
  func.func @transform_1(%arg0: i32) -> (i32, i32) {
    %c0_i32 = arith.constant 0 : i32
    %c0_i32_0 = arith.constant 0 : i32
    return %arg0, %c0_i32 : i32, i32
  }
  func.func @transform_2(%arg0: i32) -> (i32, i32) {
    %c0_i32 = arith.constant 0 : i32
    %c0_i32_0 = arith.constant 0 : i32
    return %arg0, %c0_i32 : i32, i32
  }
  func.func @transform_3(%arg0: i32) -> (i32, i32) {
    %c0_i32 = arith.constant 0 : i32
    %c0_i32_0 = arith.constant 0 : i32
    %c0_i32_1 = arith.constant 0 : i32
    return %c0_i32, %c0_i32_0 : i32, i32
  }
  func.func @transform_4(%arg0: i32) -> (i32, i32) {
    %c0_i32 = arith.constant 0 : i32
    %c0_i32_0 = arith.constant 0 : i32
    %c0_i32_1 = arith.constant 0 : i32
    return %c0_i32, %c0_i32_0 : i32, i32
  }
  func.func @transform_5(%arg0: i32) -> (i32, i32) {
    %c0_i32 = arith.constant 0 : i32
    %c0_i32_0 = arith.constant 0 : i32
    %c0_i32_1 = arith.constant 0 : i32
    return %c0_i32, %c0_i32_0 : i32, i32
  }
  func.func @transform_6(%arg0: i32) -> (i32, i32) {
    %c0_i32 = arith.constant 0 : i32
    %c0_i32_0 = arith.constant 0 : i32
    %c0_i32_1 = arith.constant 0 : i32
    return %c0_i32, %c0_i32_0 : i32, i32
  }
  func.func @transform_7(%arg0: i32) -> (i32, i32) {
    %c0_i32 = arith.constant 0 : i32
    %c0_i32_0 = arith.constant 0 : i32
    %c0_i32_1 = arith.constant 0 : i32
    return %c0_i32, %c0_i32_0 : i32, i32
  }
  func.func @transform_8(%arg0: i32) -> (i32, i32) {
    %c0_i32 = arith.constant 0 : i32
    %c0_i32_0 = arith.constant 0 : i32
    %c0_i32_1 = arith.constant 0 : i32
    return %c0_i32, %c0_i32_0 : i32, i32
  }
  func.func @transform_9(%arg0: i32) -> (i32, i32) {
    %c0_i32 = arith.constant 0 : i32
    %c0_i32_0 = arith.constant 0 : i32
    %c0_i32_1 = arith.constant 0 : i32
    return %c0_i32, %c0_i32_0 : i32, i32
  }
  func.func @transform_10(%arg0: i32) -> (i32, i32) {
    %c0_i32 = arith.constant 0 : i32
    %c0_i32_0 = arith.constant 0 : i32
    %c0_i32_1 = arith.constant 0 : i32
    return %c0_i32, %c0_i32_0 : i32, i32
  }
  func.func @transform_11(%arg0: i32) -> (i32, i32) {
    %c0_i32 = arith.constant 0 : i32
    %c0_i32_0 = arith.constant 0 : i32
    %c0_i32_1 = arith.constant 0 : i32
    return %c0_i32, %c0_i32_0 : i32, i32
  }
  func.func @transform_12(%arg0: i32) -> (i32, i32) {
    %c0_i32 = arith.constant 0 : i32
    %c0_i32_0 = arith.constant 0 : i32
    %c0_i32_1 = arith.constant 0 : i32
    return %c0_i32, %c0_i32_0 : i32, i32
  }
  func.func @transform_13(%arg0: i32) -> (i32, i32) {
    %c0_i32 = arith.constant 0 : i32
    %c0_i32_0 = arith.constant 0 : i32
    %c0_i32_1 = arith.constant 0 : i32
    return %c0_i32, %c0_i32_0 : i32, i32
  }
  func.func @transform_14(%arg0: i32) -> (i32, i32) {
    %c0_i32 = arith.constant 0 : i32
    %c0_i32_0 = arith.constant 0 : i32
    %c0_i32_1 = arith.constant 0 : i32
    return %c0_i32, %c0_i32_0 : i32, i32
  }
  func.func @transform_15(%arg0: i32) -> (i32, i32) {
    %c0_i32 = arith.constant 0 : i32
    %c0_i32_0 = arith.constant 0 : i32
    %c0_i32_1 = arith.constant 0 : i32
    return %c0_i32, %c0_i32_0 : i32, i32
  }
  func.func @transform_16(%arg0: i32) -> (i32, i32) {
    %c0_i32 = arith.constant 0 : i32
    %c0_i32_0 = arith.constant 0 : i32
    %c0_i32_1 = arith.constant 0 : i32
    return %c0_i32, %c0_i32_0 : i32, i32
  }
  func.func @transform_17(%arg0: i32) -> (i32, i32) {
    %c0_i32 = arith.constant 0 : i32
    %c0_i32_0 = arith.constant 0 : i32
    %c0_i32_1 = arith.constant 0 : i32
    return %c0_i32, %c0_i32_0 : i32, i32
  }
  func.func @transform_18(%arg0: i32) -> (i32, i32) {
    %c0_i32 = arith.constant 0 : i32
    %c0_i32_0 = arith.constant 0 : i32
    %c0_i32_1 = arith.constant 0 : i32
    return %c0_i32, %c0_i32_0 : i32, i32
  }
  func.func @transform_19(%arg0: i32) -> (i32, i32) {
    %c0_i32 = arith.constant 0 : i32
    %c0_i32_0 = arith.constant 0 : i32
    %c0_i32_1 = arith.constant 0 : i32
    return %c0_i32, %c0_i32_0 : i32, i32
  }
  func.func @transform_20(%arg0: i32) -> (i32, i32) {
    %c0_i32 = arith.constant 0 : i32
    %c0_i32_0 = arith.constant 0 : i32
    %c0_i32_1 = arith.constant 0 : i32
    return %c0_i32, %c0_i32_0 : i32, i32
  }
  func.func @transform_21(%arg0: i32) -> (i32, i32) {
    %c0_i32 = arith.constant 0 : i32
    %c0_i32_0 = arith.constant 0 : i32
    %c0_i32_1 = arith.constant 0 : i32
    return %c0_i32, %c0_i32_0 : i32, i32
  }
  func.func @transform_22(%arg0: i32) -> (i32, i32) {
    %c0_i32 = arith.constant 0 : i32
    %c0_i32_0 = arith.constant 0 : i32
    %c0_i32_1 = arith.constant 0 : i32
    return %c0_i32, %c0_i32_0 : i32, i32
  }
  func.func @transform_23(%arg0: i32) -> (i32, i32) {
    %c0_i32 = arith.constant 0 : i32
    %c0_i32_0 = arith.constant 0 : i32
    %c0_i32_1 = arith.constant 0 : i32
    return %c0_i32, %c0_i32_0 : i32, i32
  }
  func.func @transform_24(%arg0: i32) -> (i32, i32) {
    %c0_i32 = arith.constant 0 : i32
    %c0_i32_0 = arith.constant 0 : i32
    %c0_i32_1 = arith.constant 0 : i32
    return %c0_i32, %c0_i32_0 : i32, i32
  }
  func.func @transform_25(%arg0: i32) -> (i32, i32) {
    %c0_i32 = arith.constant 0 : i32
    %c0_i32_0 = arith.constant 0 : i32
    %c0_i32_1 = arith.constant 0 : i32
    return %c0_i32, %c0_i32_0 : i32, i32
  }
  func.func @transform_26(%arg0: i32) -> (i32, i32) {
    %c0_i32 = arith.constant 0 : i32
    %c0_i32_0 = arith.constant 0 : i32
    %c0_i32_1 = arith.constant 0 : i32
    return %c0_i32, %c0_i32_0 : i32, i32
  }
  func.func @transform_27(%arg0: i32) -> (i32, i32) {
    %c0_i32 = arith.constant 0 : i32
    %c0_i32_0 = arith.constant 0 : i32
    return %arg0, %c0_i32 : i32, i32
  }
}

</mosaic_0001>

<llo_original>
// kernel: tpu_custom_call.1
$region0: #{tpu_custom_call.1}
  #allocation0 [shape = 'u32[]', space=smem, size = 0x4, offset = 0x4, fixed_abs, tag = 'smem constant byte address 0x4 - core index']
  #allocation1 [shape = 'u32[72,128]{1,0:T(1,128)}', space=vmem, size = 0x9000, scoped, tag = 'internal scratch']
  %s0 = inlined_call_operand.vmem [shape: f32[32,16], index: 0, kind: input, shape index: {}]
  %s1 = inlined_call_operand.vmem [shape: f32[32,32], index: 1, kind: input, shape index: {}]
  %s2 = inlined_call_operand.vmem [shape: f32[32,8], index: 2, kind: input, shape index: {}]
  %s3 = inlined_call_operand.vmem [shape: bf16[32,64], index: 3, kind: input, shape index: {}]
  %s4 = inlined_call_operand.vmem [shape: bf16[1,64], index: 4, kind: input, shape index: {}]
  %s5 = inlined_call_operand.vmem [shape: bf16[64,64], index: 5, kind: input, shape index: {}]
  %s6 = inlined_call_operand.vmem [shape: bf16[1,64], index: 6, kind: input, shape index: {}]
  %s7 = inlined_call_operand.vmem [shape: bf16[64,128], index: 7, kind: input, shape index: {}]
  %s8 = inlined_call_operand.vmem [shape: bf16[1,128], index: 8, kind: input, shape index: {}]
  %s9 = inlined_call_operand.vmem [shape: bf16[16,32], index: 9, kind: input, shape index: {}]
  %s10 = inlined_call_operand.vmem [shape: bf16[128,32], index: 10, kind: input, shape index: {}]
  %s11 = inlined_call_operand.vmem [shape: bf16[1,32], index: 11, kind: input, shape index: {}]
  %s12 = inlined_call_operand.vmem [shape: bf16[32,32], index: 12, kind: input, shape index: {}]
  %s13 = inlined_call_operand.vmem [shape: bf16[1,32], index: 13, kind: input, shape index: {}]
  %s14 = inlined_call_operand.vmem [shape: bf16[32,16], index: 14, kind: input, shape index: {}]
  %s15 = inlined_call_operand.vmem [shape: bf16[1,16], index: 15, kind: input, shape index: {}]
  %s16 = inlined_call_operand.vmem [shape: bf16[16,16], index: 16, kind: input, shape index: {}]
  %s17 = inlined_call_operand.vmem [shape: bf16[1,16], index: 17, kind: input, shape index: {}]
  %s18 = inlined_call_operand.vmem [shape: bf16[8,32], index: 18, kind: input, shape index: {}]
  %s19 = inlined_call_operand.vmem [shape: bf16[128,32], index: 19, kind: input, shape index: {}]
  %s20 = inlined_call_operand.vmem [shape: bf16[1,32], index: 20, kind: input, shape index: {}]
  %s21 = inlined_call_operand.vmem [shape: bf16[32,32], index: 21, kind: input, shape index: {}]
  %s22 = inlined_call_operand.vmem [shape: bf16[1,32], index: 22, kind: input, shape index: {}]
  %s23 = inlined_call_operand.vmem [shape: bf16[32,16], index: 23, kind: input, shape index: {}]
  %s24 = inlined_call_operand.vmem [shape: bf16[1,16], index: 24, kind: input, shape index: {}]
  %s25 = inlined_call_operand.vmem [shape: bf16[16,16], index: 25, kind: input, shape index: {}]
  %s26 = inlined_call_operand.vmem [shape: bf16[1,16], index: 26, kind: input, shape index: {}]
  %s27 = inlined_call_operand.hbm [shape: f32[32,32], index: 27, kind: output, shape index: {}]
  %s28 = sld [smem:[#allocation0]]
  $region141: #{tpu_custom_call.1} parent=0
    _
  %s30 = ssub.s32 1, %s28
  %s31 = scalar_select 0, %s30, %s28
  $region1: #{tpu_custom_call.1} parent=0
    #allocation2 [shape = 'u8[16384]{0}', space=vmem, size = 0x4000, scoped, tag = 'output window, operand 0']
    #allocation3 [shape = 's32[2]{0}', space=sflag, size = 0x8, scoped, tag = 'scoped memory for tpu_custom_call.1']
    %32 = vsyncpa [#allocation3], 0
    %s33 = scalar_lea.sflag [#allocation3], 1
    %34 = vsyncpa %s33, 0
    loop: start=0, step=1, limit=4
    $region2: #{tpu_custom_call.1} parent=1 // loop_pre_header
      _
    $region3: #{tpu_custom_call.1} parent=1 // loop_header
      %s36 = sphi 0, %s40
      %p37 = scmp.ge.s32.totalorder %s36, 4
      %s46 = sphi 0, %s48
      %s49 = sphi 0, %s46
      %s50 = sphi 0, %s49
      %s66 = sphi 0, %s50
      %s72 = sphi 0, %s74
      %s75 = sphi 0, %s72
      %s76 = sphi 0, %s75
      %s92 = sphi 0, %s76
      %s98 = sphi 0, %s100
      %s101 = sphi 0, %s98
      %s102 = sphi 0, %s101
      %s118 = sphi 0, %s102
      %s122 = sphi 0, %s122
      %s124 = sphi 0, %s122
      %s125 = sphi 0, %s124
      %s139 = sphi 0, %s125
      %s143 = sphi 0, %s143
      %s145 = sphi 0, %s143
      %s146 = sphi 0, %s145
      %s160 = sphi 0, %s146
      %s164 = sphi 0, %s164
      %s166 = sphi 0, %s164
      %s167 = sphi 0, %s166
      %s181 = sphi 0, %s167
      %s185 = sphi 0, %s185
      %s187 = sphi 0, %s185
      %s188 = sphi 0, %s187
      %s202 = sphi 0, %s188
      %s206 = sphi 0, %s206
      %s208 = sphi 0, %s206
      %s209 = sphi 0, %s208
      %s223 = sphi 0, %s209
      %s227 = sphi 0, %s227
      %s229 = sphi 0, %s227
      %s230 = sphi 0, %s229
      %s244 = sphi 0, %s230
      %s248 = sphi 0, %s248
      %s250 = sphi 0, %s248
      %s251 = sphi 0, %s250
      %s265 = sphi 0, %s251
      %s269 = sphi 0, %s269
      %s271 = sphi 0, %s269
      %s272 = sphi 0, %s271
      %s286 = sphi 0, %s272
      %s290 = sphi 0, %s290
      %s292 = sphi 0, %s290
      %s293 = sphi 0, %s292
      %s307 = sphi 0, %s293
      %s311 = sphi 0, %s311
      %s313 = sphi 0, %s311
      %s314 = sphi 0, %s313
      %s328 = sphi 0, %s314
      %s332 = sphi 0, %s332
      %s334 = sphi 0, %s332
      %s335 = sphi 0, %s334
      %s349 = sphi 0, %s335
      %s353 = sphi 0, %s353
      %s355 = sphi 0, %s353
      %s356 = sphi 0, %s355
      %s370 = sphi 0, %s356
      %s374 = sphi 0, %s374
      %s376 = sphi 0, %s374
      %s377 = sphi 0, %s376
      %s391 = sphi 0, %s377
      %s395 = sphi 0, %s395
      %s397 = sphi 0, %s395
      %s398 = sphi 0, %s397
      %s412 = sphi 0, %s398
      %s416 = sphi 0, %s416
      %s418 = sphi 0, %s416
      %s419 = sphi 0, %s418
      %s433 = sphi 0, %s419
      %s437 = sphi 0, %s437
      %s439 = sphi 0, %s437
      %s440 = sphi 0, %s439
      %s454 = sphi 0, %s440
      %s458 = sphi 0, %s458
      %s460 = sphi 0, %s458
      %s461 = sphi 0, %s460
      %s475 = sphi 0, %s461
      %s479 = sphi 0, %s479
      %s481 = sphi 0, %s479
      %s482 = sphi 0, %s481
      %s496 = sphi 0, %s482
      %s500 = sphi 0, %s500
      %s502 = sphi 0, %s500
      %s503 = sphi 0, %s502
      %s517 = sphi 0, %s503
      %s521 = sphi 0, %s521
      %s523 = sphi 0, %s521
      %s524 = sphi 0, %s523
      %s538 = sphi 0, %s524
      %s542 = sphi 0, %s542
      %s544 = sphi 0, %s542
      %s545 = sphi 0, %s544
      %s559 = sphi 0, %s545
      %s563 = sphi 0, %s563
      %s565 = sphi 0, %s563
      %s566 = sphi 0, %s565
      %s580 = sphi 0, %s566
      %s584 = sphi 0, %s584
      %s586 = sphi 0, %s584
      %s587 = sphi 0, %s586
      %s601 = sphi 0, %s587
      %s605 = sphi 0, %s605
      %s607 = sphi 0, %s605
      %s608 = sphi 0, %s607
      %s622 = sphi 0, %s608
      %s628 = sphi 0, %s630
      %s631 = sphi 0, %s628
      %s632 = sphi 0, %s631
      %s648 = sphi 0, %s632
    $region4: #{tpu_custom_call.1} parent=1 // loop_header_branch
      %39 = sbr.rel (%p37) target = $region8
    $region5: #{tpu_custom_call.1} parent=1 // loop_body
      %s41 = ssub.s32 %s36, 1
      %s42 = ssub.s32 %s36, 2
      %s43 = sadd.s32 %s36, 1
      %s44 = ssub.s32 %s36, %s43
      %p45 = scmp.eq.s32.totalorder %s44, 0
      %s47 = sadd.s32 %s46, 1
      %s48 = scalar_select %p45, %s46, %s47
      %p51 = pneg %p45
      %p52 = scmp.eq.s32.totalorder %s36, 1
      %p53 = por %p51, %p52
      %p54 = scmp.ne.s32.totalorder %s46, %s49
      %p55 = scmp.eq.s32.totalorder %s36, 0
      %p56 = por %p54, %p55
      %p57 = scmp.ne.s32.totalorder %s46, %s49
      %p58 = scmp.eq.s32.totalorder %s41, 1
      %p59 = por %p57, %p58
      %p60 = scmp.ne.s32.totalorder %s49, %s50
      %p61 = scmp.eq.s32.totalorder %s41, 0
      %p62 = por %p60, %p61
      %p63 = scmp.ne.s32.totalorder %s49, %s50
      %p64 = scmp.eq.s32.totalorder %s42, 1
      %p65 = por %p63, %p64
      %p67 = scmp.ne.s32.totalorder %s50, %s66
      %p68 = scmp.eq.s32.totalorder %s42, 0
      %p69 = por %p67, %p68
      %s70 = ssub.s32 %s36, %s43
      %p71 = scmp.eq.s32.totalorder %s70, 0
      %s73 = sadd.s32 %s72, 1
      %s74 = scalar_select %p71, %s72, %s73
      %p77 = pneg %p71
      %p78 = scmp.eq.s32.totalorder %s36, 1
      %p79 = por %p77, %p78
      %p80 = scmp.ne.s32.totalorder %s72, %s75
      %p81 = scmp.eq.s32.totalorder %s36, 0
      %p82 = por %p80, %p81
      %p83 = scmp.ne.s32.totalorder %s72, %s75
      %p84 = scmp.eq.s32.totalorder %s41, 1
      %p85 = por %p83, %p84
      %p86 = scmp.ne.s32.totalorder %s75, %s76
      %p87 = scmp.eq.s32.totalorder %s41, 0
      %p88 = por %p86, %p87
      %p89 = scmp.ne.s32.totalorder %s75, %s76
      %p90 = scmp.eq.s32.totalorder %s42, 1
      %p91 = por %p89, %p90
      %p93 = scmp.ne.s32.totalorder %s76, %s92
      %p94 = scmp.eq.s32.totalorder %s42, 0
      %p95 = por %p93, %p94
      %s96 = ssub.s32 %s36, %s43
      %p97 = scmp.eq.s32.totalorder %s96, 0
      %s99 = sadd.s32 %s98, 1
      %s100 = scalar_select %p97, %s98, %s99
      %p103 = pneg %p97
      %p104 = scmp.eq.s32.totalorder %s36, 1
      %p105 = por %p103, %p104
      %p106 = scmp.ne.s32.totalorder %s98, %s101
      %p107 = scmp.eq.s32.totalorder %s36, 0
      %p108 = por %p106, %p107
      %p109 = scmp.ne.s32.totalorder %s98, %s101
      %p110 = scmp.eq.s32.totalorder %s41, 1
      %p111 = por %p109, %p110
      %p112 = scmp.ne.s32.totalorder %s101, %s102
      %p113 = scmp.eq.s32.totalorder %s41, 0
      %p114 = por %p112, %p113
      %p115 = scmp.ne.s32.totalorder %s101, %s102
      %p116 = scmp.eq.s32.totalorder %s42, 1
      %p117 = por %p115, %p116
      %p119 = scmp.ne.s32.totalorder %s102, %s118
      %p120 = scmp.eq.s32.totalorder %s42, 0
      %p121 = por %p119, %p120
      %s123 = sadd.s32 %s122, 1
      %p126 = scmp.eq.s32.totalorder %s36, 1
      %p127 = scmp.ne.s32.totalorder %s122, %s124
      %p128 = scmp.eq.s32.totalorder %s36, 0
      %p129 = por %p127, %p128
      %p130 = scmp.ne.s32.totalorder %s122, %s124
      %p131 = scmp.eq.s32.totalorder %s41, 1
      %p132 = por %p130, %p131
      %p133 = scmp.ne.s32.totalorder %s124, %s125
      %p134 = scmp.eq.s32.totalorder %s41, 0
      %p135 = por %p133, %p134
      %p136 = scmp.ne.s32.totalorder %s124, %s125
      %p137 = scmp.eq.s32.totalorder %s42, 1
      %p138 = por %p136, %p137
      %p140 = scmp.ne.s32.totalorder %s125, %s139
      %p141 = scmp.eq.s32.totalorder %s42, 0
      %p142 = por %p140, %p141
      %s144 = sadd.s32 %s143, 1
      %p147 = scmp.eq.s32.totalorder %s36, 1
      %p148 = scmp.ne.s32.totalorder %s143, %s145
      %p149 = scmp.eq.s32.totalorder %s36, 0
      %p150 = por %p148, %p149
      %p151 = scmp.ne.s32.totalorder %s143, %s145
      %p152 = scmp.eq.s32.totalorder %s41, 1
      %p153 = por %p151, %p152
      %p154 = scmp.ne.s32.totalorder %s145, %s146
      %p155 = scmp.eq.s32.totalorder %s41, 0
      %p156 = por %p154, %p155
      %p157 = scmp.ne.s32.totalorder %s145, %s146
      %p158 = scmp.eq.s32.totalorder %s42, 1
      %p159 = por %p157, %p158
      %p161 = scmp.ne.s32.totalorder %s146, %s160
      %p162 = scmp.eq.s32.totalorder %s42, 0
      %p163 = por %p161, %p162
      %s165 = sadd.s32 %s164, 1
      %p168 = scmp.eq.s32.totalorder %s36, 1
      %p169 = scmp.ne.s32.totalorder %s164, %s166
      %p170 = scmp.eq.s32.totalorder %s36, 0
      %p171 = por %p169, %p170
      %p172 = scmp.ne.s32.totalorder %s164, %s166
      %p173 = scmp.eq.s32.totalorder %s41, 1
      %p174 = por %p172, %p173
      %p175 = scmp.ne.s32.totalorder %s166, %s167
      %p176 = scmp.eq.s32.totalorder %s41, 0
      %p177 = por %p175, %p176
      %p178 = scmp.ne.s32.totalorder %s166, %s167
      %p179 = scmp.eq.s32.totalorder %s42, 1
      %p180 = por %p178, %p179
      %p182 = scmp.ne.s32.totalorder %s167, %s181
      %p183 = scmp.eq.s32.totalorder %s42, 0
      %p184 = por %p182, %p183
      %s186 = sadd.s32 %s185, 1
      %p189 = scmp.eq.s32.totalorder %s36, 1
      %p190 = scmp.ne.s32.totalorder %s185, %s187
      %p191 = scmp.eq.s32.totalorder %s36, 0
      %p192 = por %p190, %p191
      %p193 = scmp.ne.s32.totalorder %s185, %s187
      %p194 = scmp.eq.s32.totalorder %s41, 1
      %p195 = por %p193, %p194
      %p196 = scmp.ne.s32.totalorder %s187, %s188
      %p197 = scmp.eq.s32.totalorder %s41, 0
      %p198 = por %p196, %p197
      %p199 = scmp.ne.s32.totalorder %s187, %s188
      %p200 = scmp.eq.s32.totalorder %s42, 1
      %p201 = por %p199, %p200
      %p203 = scmp.ne.s32.totalorder %s188, %s202
      %p204 = scmp.eq.s32.totalorder %s42, 0
      %p205 = por %p203, %p204
      %s207 = sadd.s32 %s206, 1
      %p210 = scmp.eq.s32.totalorder %s36, 1
      %p211 = scmp.ne.s32.totalorder %s206, %s208
      %p212 = scmp.eq.s32.totalorder %s36, 0
      %p213 = por %p211, %p212
      %p214 = scmp.ne.s32.totalorder %s206, %s208
      %p215 = scmp.eq.s32.totalorder %s41, 1
      %p216 = por %p214, %p215
      %p217 = scmp.ne.s32.totalorder %s208, %s209
      %p218 = scmp.eq.s32.totalorder %s41, 0
      %p219 = por %p217, %p218
      %p220 = scmp.ne.s32.totalorder %s208, %s209
      %p221 = scmp.eq.s32.totalorder %s42, 1
      %p222 = por %p220, %p221
      %p224 = scmp.ne.s32.totalorder %s209, %s223
      %p225 = scmp.eq.s32.totalorder %s42, 0
      %p226 = por %p224, %p225
      %s228 = sadd.s32 %s227, 1
      %p231 = scmp.eq.s32.totalorder %s36, 1
      %p232 = scmp.ne.s32.totalorder %s227, %s229
      %p233 = scmp.eq.s32.totalorder %s36, 0
      %p234 = por %p232, %p233
      %p235 = scmp.ne.s32.totalorder %s227, %s229
      %p236 = scmp.eq.s32.totalorder %s41, 1
      %p237 = por %p235, %p236
      %p238 = scmp.ne.s32.totalorder %s229, %s230
      %p239 = scmp.eq.s32.totalorder %s41, 0
      %p240 = por %p238, %p239
      %p241 = scmp.ne.s32.totalorder %s229, %s230
      %p242 = scmp.eq.s32.totalorder %s42, 1
      %p243 = por %p241, %p242
      %p245 = scmp.ne.s32.totalorder %s230, %s244
      %p246 = scmp.eq.s32.totalorder %s42, 0
      %p247 = por %p245, %p246
      %s249 = sadd.s32 %s248, 1
      %p252 = scmp.eq.s32.totalorder %s36, 1
      %p253 = scmp.ne.s32.totalorder %s248, %s250
      %p254 = scmp.eq.s32.totalorder %s36, 0
      %p255 = por %p253, %p254
      %p256 = scmp.ne.s32.totalorder %s248, %s250
      %p257 = scmp.eq.s32.totalorder %s41, 1
      %p258 = por %p256, %p257
      %p259 = scmp.ne.s32.totalorder %s250, %s251
      %p260 = scmp.eq.s32.totalorder %s41, 0
      %p261 = por %p259, %p260
      %p262 = scmp.ne.s32.totalorder %s250, %s251
      %p263 = scmp.eq.s32.totalorder %s42, 1
      %p264 = por %p262, %p263
      %p266 = scmp.ne.s32.totalorder %s251, %s265
      %p267 = scmp.eq.s32.totalorder %s42, 0
      %p268 = por %p266, %p267
      %s270 = sadd.s32 %s269, 1
      %p273 = scmp.eq.s32.totalorder %s36, 1
      %p274 = scmp.ne.s32.totalorder %s269, %s271
      %p275 = scmp.eq.s32.totalorder %s36, 0
      %p276 = por %p274, %p275
      %p277 = scmp.ne.s32.totalorder %s269, %s271
      %p278 = scmp.eq.s32.totalorder %s41, 1
      %p279 = por %p277, %p278
      %p280 = scmp.ne.s32.totalorder %s271, %s272
      %p281 = scmp.eq.s32.totalorder %s41, 0
      %p282 = por %p280, %p281
      %p283 = scmp.ne.s32.totalorder %s271, %s272
      %p284 = scmp.eq.s32.totalorder %s42, 1
      %p285 = por %p283, %p284
      %p287 = scmp.ne.s32.totalorder %s272, %s286
      %p288 = scmp.eq.s32.totalorder %s42, 0
      %p289 = por %p287, %p288
      %s291 = sadd.s32 %s290, 1
      %p294 = scmp.eq.s32.totalorder %s36, 1
      %p295 = scmp.ne.s32.totalorder %s290, %s292
      %p296 = scmp.eq.s32.totalorder %s36, 0
      %p297 = por %p295, %p296
      %p298 = scmp.ne.s32.totalorder %s290, %s292
      %p299 = scmp.eq.s32.totalorder %s41, 1
      %p300 = por %p298, %p299
      %p301 = scmp.ne.s32.totalorder %s292, %s293
      %p302 = scmp.eq.s32.totalorder %s41, 0
      %p303 = por %p301, %p302
      %p304 = scmp.ne.s32.totalorder %s292, %s293
      %p305 = scmp.eq.s32.totalorder %s42, 1
      %p306 = por %p304, %p305
      %p308 = scmp.ne.s32.totalorder %s293, %s307
      %p309 = scmp.eq.s32.totalorder %s42, 0
      %p310 = por %p308, %p309
      %s312 = sadd.s32 %s311, 1
      %p315 = scmp.eq.s32.totalorder %s36, 1
      %p316 = scmp.ne.s32.totalorder %s311, %s313
      %p317 = scmp.eq.s32.totalorder %s36, 0
      %p318 = por %p316, %p317
      %p319 = scmp.ne.s32.totalorder %s311, %s313
      %p320 = scmp.eq.s32.totalorder %s41, 1
      %p321 = por %p319, %p320
      %p322 = scmp.ne.s32.totalorder %s313, %s314
      %p323 = scmp.eq.s32.totalorder %s41, 0
      %p324 = por %p322, %p323
      %p325 = scmp.ne.s32.totalorder %s313, %s314
      %p326 = scmp.eq.s32.totalorder %s42, 1
      %p327 = por %p325, %p326
      %p329 = scmp.ne.s32.totalorder %s314, %s328
      %p330 = scmp.eq.s32.totalorder %s42, 0
      %p331 = por %p329, %p330
      %s333 = sadd.s32 %s332, 1
      %p336 = scmp.eq.s32.totalorder %s36, 1
      %p337 = scmp.ne.s32.totalorder %s332, %s334
      %p338 = scmp.eq.s32.totalorder %s36, 0
      %p339 = por %p337, %p338
      %p340 = scmp.ne.s32.totalorder %s332, %s334
      %p341 = scmp.eq.s32.totalorder %s41, 1
      %p342 = por %p340, %p341
      %p343 = scmp.ne.s32.totalorder %s334, %s335
      %p344 = scmp.eq.s32.totalorder %s41, 0
      %p345 = por %p343, %p344
      %p346 = scmp.ne.s32.totalorder %s334, %s335
      %p347 = scmp.eq.s32.totalorder %s42, 1
      %p348 = por %p346, %p347
      %p350 = scmp.ne.s32.totalorder %s335, %s349
      %p351 = scmp.eq.s32.totalorder %s42, 0
      %p352 = por %p350, %p351
      %s354 = sadd.s32 %s353, 1
      %p357 = scmp.eq.s32.totalorder %s36, 1
      %p358 = scmp.ne.s32.totalorder %s353, %s355
      %p359 = scmp.eq.s32.totalorder %s36, 0
      %p360 = por %p358, %p359
      %p361 = scmp.ne.s32.totalorder %s353, %s355
      %p362 = scmp.eq.s32.totalorder %s41, 1
      %p363 = por %p361, %p362
      %p364 = scmp.ne.s32.totalorder %s355, %s356
      %p365 = scmp.eq.s32.totalorder %s41, 0
      %p366 = por %p364, %p365
      %p367 = scmp.ne.s32.totalorder %s355, %s356
      %p368 = scmp.eq.s32.totalorder %s42, 1
      %p369 = por %p367, %p368
      %p371 = scmp.ne.s32.totalorder %s356, %s370
      %p372 = scmp.eq.s32.totalorder %s42, 0
      %p373 = por %p371, %p372
      %s375 = sadd.s32 %s374, 1
      %p378 = scmp.eq.s32.totalorder %s36, 1
      %p379 = scmp.ne.s32.totalorder %s374, %s376
      %p380 = scmp.eq.s32.totalorder %s36, 0
      %p381 = por %p379, %p380
      %p382 = scmp.ne.s32.totalorder %s374, %s376
      %p383 = scmp.eq.s32.totalorder %s41, 1
      %p384 = por %p382, %p383
      %p385 = scmp.ne.s32.totalorder %s376, %s377
      %p386 = scmp.eq.s32.totalorder %s41, 0
      %p387 = por %p385, %p386
      %p388 = scmp.ne.s32.totalorder %s376, %s377
      %p389 = scmp.eq.s32.totalorder %s42, 1
      %p390 = por %p388, %p389
      %p392 = scmp.ne.s32.totalorder %s377, %s391
      %p393 = scmp.eq.s32.totalorder %s42, 0
      %p394 = por %p392, %p393
      %s396 = sadd.s32 %s395, 1
      %p399 = scmp.eq.s32.totalorder %s36, 1
      %p400 = scmp.ne.s32.totalorder %s395, %s397
      %p401 = scmp.eq.s32.totalorder %s36, 0
      %p402 = por %p400, %p401
      %p403 = scmp.ne.s32.totalorder %s395, %s397
      %p404 = scmp.eq.s32.totalorder %s41, 1
      %p405 = por %p403, %p404
      %p406 = scmp.ne.s32.totalorder %s397, %s398
      %p407 = scmp.eq.s32.totalorder %s41, 0
      %p408 = por %p406, %p407
      %p409 = scmp.ne.s32.totalorder %s397, %s398
      %p410 = scmp.eq.s32.totalorder %s42, 1
      %p411 = por %p409, %p410
      %p413 = scmp.ne.s32.totalorder %s398, %s412
      %p414 = scmp.eq.s32.totalorder %s42, 0
      %p415 = por %p413, %p414
      %s417 = sadd.s32 %s416, 1
      %p420 = scmp.eq.s32.totalorder %s36, 1
      %p421 = scmp.ne.s32.totalorder %s416, %s418
      %p422 = scmp.eq.s32.totalorder %s36, 0
      %p423 = por %p421, %p422
      %p424 = scmp.ne.s32.totalorder %s416, %s418
      %p425 = scmp.eq.s32.totalorder %s41, 1
      %p426 = por %p424, %p425
      %p427 = scmp.ne.s32.totalorder %s418, %s419
      %p428 = scmp.eq.s32.totalorder %s41, 0
      %p429 = por %p427, %p428
      %p430 = scmp.ne.s32.totalorder %s418, %s419
      %p431 = scmp.eq.s32.totalorder %s42, 1
      %p432 = por %p430, %p431
      %p434 = scmp.ne.s32.totalorder %s419, %s433
      %p435 = scmp.eq.s32.totalorder %s42, 0
      %p436 = por %p434, %p435
      %s438 = sadd.s32 %s437, 1
      %p441 = scmp.eq.s32.totalorder %s36, 1
      %p442 = scmp.ne.s32.totalorder %s437, %s439
      %p443 = scmp.eq.s32.totalorder %s36, 0
      %p444 = por %p442, %p443
      %p445 = scmp.ne.s32.totalorder %s437, %s439
      %p446 = scmp.eq.s32.totalorder %s41, 1
      %p447 = por %p445, %p446
      %p448 = scmp.ne.s32.totalorder %s439, %s440
      %p449 = scmp.eq.s32.totalorder %s41, 0
      %p450 = por %p448, %p449
      %p451 = scmp.ne.s32.totalorder %s439, %s440
      %p452 = scmp.eq.s32.totalorder %s42, 1
      %p453 = por %p451, %p452
      %p455 = scmp.ne.s32.totalorder %s440, %s454
      %p456 = scmp.eq.s32.totalorder %s42, 0
      %p457 = por %p455, %p456
      %s459 = sadd.s32 %s458, 1
      %p462 = scmp.eq.s32.totalorder %s36, 1
      %p463 = scmp.ne.s32.totalorder %s458, %s460
      %p464 = scmp.eq.s32.totalorder %s36, 0
      %p465 = por %p463, %p464
      %p466 = scmp.ne.s32.totalorder %s458, %s460
      %p467 = scmp.eq.s32.totalorder %s41, 1
      %p468 = por %p466, %p467
      %p469 = scmp.ne.s32.totalorder %s460, %s461
      %p470 = scmp.eq.s32.totalorder %s41, 0
      %p471 = por %p469, %p470
      %p472 = scmp.ne.s32.totalorder %s460, %s461
      %p473 = scmp.eq.s32.totalorder %s42, 1
      %p474 = por %p472, %p473
      %p476 = scmp.ne.s32.totalorder %s461, %s475
      %p477 = scmp.eq.s32.totalorder %s42, 0
      %p478 = por %p476, %p477
      %s480 = sadd.s32 %s479, 1
      %p483 = scmp.eq.s32.totalorder %s36, 1
      %p484 = scmp.ne.s32.totalorder %s479, %s481
      %p485 = scmp.eq.s32.totalorder %s36, 0
      %p486 = por %p484, %p485
      %p487 = scmp.ne.s32.totalorder %s479, %s481
      %p488 = scmp.eq.s32.totalorder %s41, 1
      %p489 = por %p487, %p488
      %p490 = scmp.ne.s32.totalorder %s481, %s482
      %p491 = scmp.eq.s32.totalorder %s41, 0
      %p492 = por %p490, %p491
      %p493 = scmp.ne.s32.totalorder %s481, %s482
      %p494 = scmp.eq.s32.totalorder %s42, 1
      %p495 = por %p493, %p494
      %p497 = scmp.ne.s32.totalorder %s482, %s496
      %p498 = scmp.eq.s32.totalorder %s42, 0
      %p499 = por %p497, %p498
      %s501 = sadd.s32 %s500, 1
      %p504 = scmp.eq.s32.totalorder %s36, 1
      %p505 = scmp.ne.s32.totalorder %s500, %s502
      %p506 = scmp.eq.s32.totalorder %s36, 0
      %p507 = por %p505, %p506
      %p508 = scmp.ne.s32.totalorder %s500, %s502
      %p509 = scmp.eq.s32.totalorder %s41, 1
      %p510 = por %p508, %p509
      %p511 = scmp.ne.s32.totalorder %s502, %s503
      %p512 = scmp.eq.s32.totalorder %s41, 0
      %p513 = por %p511, %p512
      %p514 = scmp.ne.s32.totalorder %s502, %s503
      %p515 = scmp.eq.s32.totalorder %s42, 1
      %p516 = por %p514, %p515
      %p518 = scmp.ne.s32.totalorder %s503, %s517
      %p519 = scmp.eq.s32.totalorder %s42, 0
      %p520 = por %p518, %p519
      %s522 = sadd.s32 %s521, 1
      %p525 = scmp.eq.s32.totalorder %s36, 1
      %p526 = scmp.ne.s32.totalorder %s521, %s523
      %p527 = scmp.eq.s32.totalorder %s36, 0
      %p528 = por %p526, %p527
      %p529 = scmp.ne.s32.totalorder %s521, %s523
      %p530 = scmp.eq.s32.totalorder %s41, 1
      %p531 = por %p529, %p530
      %p532 = scmp.ne.s32.totalorder %s523, %s524
      %p533 = scmp.eq.s32.totalorder %s41, 0
      %p534 = por %p532, %p533
      %p535 = scmp.ne.s32.totalorder %s523, %s524
      %p536 = scmp.eq.s32.totalorder %s42, 1
      %p537 = por %p535, %p536
      %p539 = scmp.ne.s32.totalorder %s524, %s538
      %p540 = scmp.eq.s32.totalorder %s42, 0
      %p541 = por %p539, %p540
      %s543 = sadd.s32 %s542, 1
      %p546 = scmp.eq.s32.totalorder %s36, 1
      %p547 = scmp.ne.s32.totalorder %s542, %s544
      %p548 = scmp.eq.s32.totalorder %s36, 0
      %p549 = por %p547, %p548
      %p550 = scmp.ne.s32.totalorder %s542, %s544
      %p551 = scmp.eq.s32.totalorder %s41, 1
      %p552 = por %p550, %p551
      %p553 = scmp.ne.s32.totalorder %s544, %s545
      %p554 = scmp.eq.s32.totalorder %s41, 0
      %p555 = por %p553, %p554
      %p556 = scmp.ne.s32.totalorder %s544, %s545
      %p557 = scmp.eq.s32.totalorder %s42, 1
      %p558 = por %p556, %p557
      %p560 = scmp.ne.s32.totalorder %s545, %s559
      %p561 = scmp.eq.s32.totalorder %s42, 0
      %p562 = por %p560, %p561
      %s564 = sadd.s32 %s563, 1
      %p567 = scmp.eq.s32.totalorder %s36, 1
      %p568 = scmp.ne.s32.totalorder %s563, %s565
      %p569 = scmp.eq.s32.totalorder %s36, 0
      %p570 = por %p568, %p569
      %p571 = scmp.ne.s32.totalorder %s563, %s565
      %p572 = scmp.eq.s32.totalorder %s41, 1
      %p573 = por %p571, %p572
      %p574 = scmp.ne.s32.totalorder %s565, %s566
      %p575 = scmp.eq.s32.totalorder %s41, 0
      %p576 = por %p574, %p575
      %p577 = scmp.ne.s32.totalorder %s565, %s566
      %p578 = scmp.eq.s32.totalorder %s42, 1
      %p579 = por %p577, %p578
      %p581 = scmp.ne.s32.totalorder %s566, %s580
      %p582 = scmp.eq.s32.totalorder %s42, 0
      %p583 = por %p581, %p582
      %s585 = sadd.s32 %s584, 1
      %p588 = scmp.eq.s32.totalorder %s36, 1
      %p589 = scmp.ne.s32.totalorder %s584, %s586
      %p590 = scmp.eq.s32.totalorder %s36, 0
      %p591 = por %p589, %p590
      %p592 = scmp.ne.s32.totalorder %s584, %s586
      %p593 = scmp.eq.s32.totalorder %s41, 1
      %p594 = por %p592, %p593
      %p595 = scmp.ne.s32.totalorder %s586, %s587
      %p596 = scmp.eq.s32.totalorder %s41, 0
      %p597 = por %p595, %p596
      %p598 = scmp.ne.s32.totalorder %s586, %s587
      %p599 = scmp.eq.s32.totalorder %s42, 1
      %p600 = por %p598, %p599
      %p602 = scmp.ne.s32.totalorder %s587, %s601
      %p603 = scmp.eq.s32.totalorder %s42, 0
      %p604 = por %p602, %p603
      %s606 = sadd.s32 %s605, 1
      %p609 = scmp.eq.s32.totalorder %s36, 1
      %p610 = scmp.ne.s32.totalorder %s605, %s607
      %p611 = scmp.eq.s32.totalorder %s36, 0
      %p612 = por %p610, %p611
      %p613 = scmp.ne.s32.totalorder %s605, %s607
      %p614 = scmp.eq.s32.totalorder %s41, 1
      %p615 = por %p613, %p614
      %p616 = scmp.ne.s32.totalorder %s607, %s608
      %p617 = scmp.eq.s32.totalorder %s41, 0
      %p618 = por %p616, %p617
      %p619 = scmp.ne.s32.totalorder %s607, %s608
      %p620 = scmp.eq.s32.totalorder %s42, 1
      %p621 = por %p619, %p620
      %p623 = scmp.ne.s32.totalorder %s608, %s622
      %p624 = scmp.eq.s32.totalorder %s42, 0
      %p625 = por %p623, %p624
      %s626 = ssub.s32 %s36, %s43
      %p627 = scmp.eq.s32.totalorder %s626, 0
      %s629 = sadd.s32 %s628, 1
      %s630 = scalar_select %p627, %s628, %s629
      %p633 = pneg %p627
      %p634 = scmp.eq.s32.totalorder %s36, 1
      %p635 = por %p633, %p634
      %p636 = scmp.ne.s32.totalorder %s628, %s631
      %p637 = scmp.eq.s32.totalorder %s36, 0
      %p638 = por %p636, %p637
      %p639 = scmp.ne.s32.totalorder %s628, %s631
      %p640 = scmp.eq.s32.totalorder %s41, 1
      %p641 = por %p639, %p640
      %p642 = scmp.ne.s32.totalorder %s631, %s632
      %p643 = scmp.eq.s32.totalorder %s41, 0
      %p644 = por %p642, %p643
      %p645 = scmp.ne.s32.totalorder %s631, %s632
      %p646 = scmp.eq.s32.totalorder %s42, 1
      %p647 = por %p645, %p646
      %p649 = scmp.ne.s32.totalorder %s632, %s648
      %p650 = scmp.eq.s32.totalorder %s42, 0
      %p651 = por %p649, %p650
      %p652 = scmp.le.s32.totalorder 1, %s36
      %p653 = scmp.lt.s32.totalorder %s36, 3
      %p654 = pnand %p652, %p653
      %p655 = pneg %p654
      // Predicated region
      $region9: #{tpu_custom_call.1} parent=5 // pred_check
        _
      $region10: #{tpu_custom_call.1} parent=5 // pred_check_branch
        %657 = sbr.rel (%p654) target = $region12
      $region11: #{tpu_custom_call.1} parent=5 // pred_region
        %s658 = ssub.s32 %s36, 1
        // Predicated region
        $region13: #{tpu_custom_call.1} parent=11 // pred_check
          %p659 = pneg %p135
        $region14: #{tpu_custom_call.1} parent=11 // pred_check_branch
          %661 = sbr.rel (%p659) target = $region16
        $region15: #{tpu_custom_call.1} parent=11 // pred_region
          _
        $region16: #{tpu_custom_call.1} parent=11 // pred_fallthru
          _
        // Predicated region
        $region17: #{tpu_custom_call.1} parent=11 // pred_check
          %p662 = pneg %p156
        $region18: #{tpu_custom_call.1} parent=11 // pred_check_branch
          %664 = sbr.rel (%p662) target = $region20
        $region19: #{tpu_custom_call.1} parent=11 // pred_region
          _
        $region20: #{tpu_custom_call.1} parent=11 // pred_fallthru
          _
        // Predicated region
        $region21: #{tpu_custom_call.1} parent=11 // pred_check
          %p665 = pneg %p177
        $region22: #{tpu_custom_call.1} parent=11 // pred_check_branch
          %667 = sbr.rel (%p665) target = $region24
        $region23: #{tpu_custom_call.1} parent=11 // pred_region
          _
        $region24: #{tpu_custom_call.1} parent=11 // pred_fallthru
          _
        // Predicated region
        $region25: #{tpu_custom_call.1} parent=11 // pred_check
          %p668 = pneg %p198
        $region26: #{tpu_custom_call.1} parent=11 // pred_check_branch
          %670 = sbr.rel (%p668) target = $region28
        $region27: #{tpu_custom_call.1} parent=11 // pred_region
          _
        $region28: #{tpu_custom_call.1} parent=11 // pred_fallthru
          _
        // Predicated region
        $region29: #{tpu_custom_call.1} parent=11 // pred_check
          %p671 = pneg %p219
        $region30: #{tpu_custom_call.1} parent=11 // pred_check_branch
          %673 = sbr.rel (%p671) target = $region32
        $region31: #{tpu_custom_call.1} parent=11 // pred_region
          _
        $region32: #{tpu_custom_call.1} parent=11 // pred_fallthru
          _
        // Predicated region
        $region33: #{tpu_custom_call.1} parent=11 // pred_check
          %p674 = pneg %p240
        $region34: #{tpu_custom_call.1} parent=11 // pred_check_branch
          %676 = sbr.rel (%p674) target = $region36
        $region35: #{tpu_custom_call.1} parent=11 // pred_region
          _
        $region36: #{tpu_custom_call.1} parent=11 // pred_fallthru
          _
        // Predicated region
        $region37: #{tpu_custom_call.1} parent=11 // pred_check
          %p677 = pneg %p261
        $region38: #{tpu_custom_call.1} parent=11 // pred_check_branch
          %679 = sbr.rel (%p677) target = $region40
        $region39: #{tpu_custom_call.1} parent=11 // pred_region
          _
        $region40: #{tpu_custom_call.1} parent=11 // pred_fallthru
          _
        // Predicated region
        $region41: #{tpu_custom_call.1} parent=11 // pred_check
          %p680 = pneg %p282
        $region42: #{tpu_custom_call.1} parent=11 // pred_check_branch
          %682 = sbr.rel (%p680) target = $region44
        $region43: #{tpu_custom_call.1} parent=11 // pred_region
          _
        $region44: #{tpu_custom_call.1} parent=11 // pred_fallthru
          _
        // Predicated region
        $region45: #{tpu_custom_call.1} parent=11 // pred_check
          %p683 = pneg %p303
        $region46: #{tpu_custom_call.1} parent=11 // pred_check_branch
          %685 = sbr.rel (%p683) target = $region48
        $region47: #{tpu_custom_call.1} parent=11 // pred_region
          _
        $region48: #{tpu_custom_call.1} parent=11 // pred_fallthru
          _
        // Predicated region
        $region49: #{tpu_custom_call.1} parent=11 // pred_check
          %p686 = pneg %p324
        $region50: #{tpu_custom_call.1} parent=11 // pred_check_branch
          %688 = sbr.rel (%p686) target = $region52
        $region51: #{tpu_custom_call.1} parent=11 // pred_region
          _
        $region52: #{tpu_custom_call.1} parent=11 // pred_fallthru
          _
        // Predicated region
        $region53: #{tpu_custom_call.1} parent=11 // pred_check
          %p689 = pneg %p345
        $region54: #{tpu_custom_call.1} parent=11 // pred_check_branch
          %691 = sbr.rel (%p689) target = $region56
        $region55: #{tpu_custom_call.1} parent=11 // pred_region
          _
        $region56: #{tpu_custom_call.1} parent=11 // pred_fallthru
          _
        // Predicated region
        $region57: #{tpu_custom_call.1} parent=11 // pred_check
          %p692 = pneg %p366
        $region58: #{tpu_custom_call.1} parent=11 // pred_check_branch
          %694 = sbr.rel (%p692) target = $region60
        $region59: #{tpu_custom_call.1} parent=11 // pred_region
          _
        $region60: #{tpu_custom_call.1} parent=11 // pred_fallthru
          _
        // Predicated region
        $region61: #{tpu_custom_call.1} parent=11 // pred_check
          %p695 = pneg %p387
        $region62: #{tpu_custom_call.1} parent=11 // pred_check_branch
          %697 = sbr.rel (%p695) target = $region64
        $region63: #{tpu_custom_call.1} parent=11 // pred_region
          _
        $region64: #{tpu_custom_call.1} parent=11 // pred_fallthru
          _
        // Predicated region
        $region65: #{tpu_custom_call.1} parent=11 // pred_check
          %p698 = pneg %p408
        $region66: #{tpu_custom_call.1} parent=11 // pred_check_branch
          %700 = sbr.rel (%p698) target = $region68
        $region67: #{tpu_custom_call.1} parent=11 // pred_region
          _
        $region68: #{tpu_custom_call.1} parent=11 // pred_fallthru
          _
        // Predicated region
        $region69: #{tpu_custom_call.1} parent=11 // pred_check
          %p701 = pneg %p429
        $region70: #{tpu_custom_call.1} parent=11 // pred_check_branch
          %703 = sbr.rel (%p701) target = $region72
        $region71: #{tpu_custom_call.1} parent=11 // pred_region
          _
        $region72: #{tpu_custom_call.1} parent=11 // pred_fallthru
          _
        // Predicated region
        $region73: #{tpu_custom_call.1} parent=11 // pred_check
          %p704 = pneg %p450
        $region74: #{tpu_custom_call.1} parent=11 // pred_check_branch
          %706 = sbr.rel (%p704) target = $region76
        $region75: #{tpu_custom_call.1} parent=11 // pred_region
          _
        $region76: #{tpu_custom_call.1} parent=11 // pred_fallthru
          _
        // Predicated region
        $region77: #{tpu_custom_call.1} parent=11 // pred_check
          %p707 = pneg %p471
        $region78: #{tpu_custom_call.1} parent=11 // pred_check_branch
          %709 = sbr.rel (%p707) target = $region80
        $region79: #{tpu_custom_call.1} parent=11 // pred_region
          _
        $region80: #{tpu_custom_call.1} parent=11 // pred_fallthru
          _
        // Predicated region
        $region81: #{tpu_custom_call.1} parent=11 // pred_check
          %p710 = pneg %p492
        $region82: #{tpu_custom_call.1} parent=11 // pred_check_branch
          %712 = sbr.rel (%p710) target = $region84
        $region83: #{tpu_custom_call.1} parent=11 // pred_region
          _
        $region84: #{tpu_custom_call.1} parent=11 // pred_fallthru
          _
        // Predicated region
        $region85: #{tpu_custom_call.1} parent=11 // pred_check
          %p713 = pneg %p513
        $region86: #{tpu_custom_call.1} parent=11 // pred_check_branch
          %715 = sbr.rel (%p713) target = $region88
        $region87: #{tpu_custom_call.1} parent=11 // pred_region
          _
        $region88: #{tpu_custom_call.1} parent=11 // pred_fallthru
          _
        // Predicated region
        $region89: #{tpu_custom_call.1} parent=11 // pred_check
          %p716 = pneg %p534
        $region90: #{tpu_custom_call.1} parent=11 // pred_check_branch
          %718 = sbr.rel (%p716) target = $region92
        $region91: #{tpu_custom_call.1} parent=11 // pred_region
          _
        $region92: #{tpu_custom_call.1} parent=11 // pred_fallthru
          _
        // Predicated region
        $region93: #{tpu_custom_call.1} parent=11 // pred_check
          %p719 = pneg %p555
        $region94: #{tpu_custom_call.1} parent=11 // pred_check_branch
          %721 = sbr.rel (%p719) target = $region96
        $region95: #{tpu_custom_call.1} parent=11 // pred_region
          _
        $region96: #{tpu_custom_call.1} parent=11 // pred_fallthru
          _
        // Predicated region
        $region97: #{tpu_custom_call.1} parent=11 // pred_check
          %p722 = pneg %p576
        $region98: #{tpu_custom_call.1} parent=11 // pred_check_branch
          %724 = sbr.rel (%p722) target = $region100
        $region99: #{tpu_custom_call.1} parent=11 // pred_region
          _
        $region100: #{tpu_custom_call.1} parent=11 // pred_fallthru
          _
        // Predicated region
        $region101: #{tpu_custom_call.1} parent=11 // pred_check
          %p725 = pneg %p597
        $region102: #{tpu_custom_call.1} parent=11 // pred_check_branch
          %727 = sbr.rel (%p725) target = $region104
        $region103: #{tpu_custom_call.1} parent=11 // pred_region
          _
        $region104: #{tpu_custom_call.1} parent=11 // pred_fallthru
          _
        // Predicated region
        $region105: #{tpu_custom_call.1} parent=11 // pred_check
          %p728 = pneg %p618
        $region106: #{tpu_custom_call.1} parent=11 // pred_check_branch
          %730 = sbr.rel (%p728) target = $region108
        $region107: #{tpu_custom_call.1} parent=11 // pred_region
          _
        $region108: #{tpu_custom_call.1} parent=11 // pred_fallthru
          _
      $region12: #{tpu_custom_call.1} parent=5 // pred_fallthru
        _
      %p731 = scmp.lt.s32.totalorder %s36, 2
      // Predicated region
      $region109: #{tpu_custom_call.1} parent=5 // pred_check
        %p732 = pneg %p731
      $region110: #{tpu_custom_call.1} parent=5 // pred_check_branch
        %734 = sbr.rel (%p732) target = $region112
      $region111: #{tpu_custom_call.1} parent=5 // pred_region
        // Predicated region
        $region113: #{tpu_custom_call.1} parent=111 // pred_check
          %p735 = pneg %p56
        $region114: #{tpu_custom_call.1} parent=111 // pred_check_branch
          %737 = sbr.rel (%p735) target = $region116
        $region115: #{tpu_custom_call.1} parent=111 // pred_region
          %s738 = smul.u32 2, %s36
          %p739 = scmp.lt.s32.totalorder %s738, 3
          %s740 = scalar_select %p739, %s738, 3
          %s741 = smul.addr %s740, 8
          %s742 = scalar_lea.vmem %s0, %s741
          %s743 = smul.u32 2, %s36
        $region116: #{tpu_custom_call.1} parent=111 // pred_fallthru
          _
        // Predicated region
        $region117: #{tpu_custom_call.1} parent=111 // pred_check
          %p744 = pneg %p82
        $region118: #{tpu_custom_call.1} parent=111 // pred_check_branch
          %746 = sbr.rel (%p744) target = $region120
        $region119: #{tpu_custom_call.1} parent=111 // pred_region
          %s747 = smul.u32 2, %s36
          %p748 = scmp.lt.s32.totalorder %s747, 3
          %s749 = scalar_select %p748, %s747, 3
          %s750 = smul.addr %s749, 8
          %s751 = scalar_lea.vmem %s1, %s750
          %s752 = smul.u32 2, %s36
        $region120: #{tpu_custom_call.1} parent=111 // pred_fallthru
          _
        // Predicated region
        $region121: #{tpu_custom_call.1} parent=111 // pred_check
          %p753 = pneg %p108
        $region122: #{tpu_custom_call.1} parent=111 // pred_check_branch
          %755 = sbr.rel (%p753) target = $region124
        $region123: #{tpu_custom_call.1} parent=111 // pred_region
          %s756 = smul.u32 2, %s36
          %p757 = scmp.lt.s32.totalorder %s756, 3
          %s758 = scalar_select %p757, %s756, 3
          %s759 = smul.addr %s758, 8
          %s760 = scalar_lea.vmem %s2, %s759
          %s761 = smul.u32 2, %s36
        $region124: #{tpu_custom_call.1} parent=111 // pred_fallthru
          _
      $region112: #{tpu_custom_call.1} parent=5 // pred_fallthru
        _
      %p762 = scmp.le.s32.totalorder 1, %s36
      %p763 = scmp.lt.s32.totalorder %s36, 3
      %p764 = pnand %p762, %p763
      %p765 = pneg %p764
      // Predicated region
      $region125: #{tpu_custom_call.1} parent=5 // pred_check
        _
      $region126: #{tpu_custom_call.1} parent=5 // pred_check_branch
        %767 = sbr.rel (%p764) target = $region128
      $region127: #{tpu_custom_call.1} parent=5 // pred_region
        %s768 = ssub.s32 %s36, 1
        %s769 = smul.u32 2, %s41
        %p770 = scmp.lt.s32.totalorder %s769, 3
        %s771 = scalar_select %p770, %s769, 3
        %s772 = smul.addr %s771, 8
        %s773 = scalar_lea.vmem %s0, %s772
        %p774 = pneg %p62
        %p775 = pneg %p59
        %s776 = smul.u32 2, %s41
        %p777 = scmp.lt.s32.totalorder %s776, 3
        %s778 = scalar_select %p777, %s776, 3
        %s779 = smul.addr %s778, 8
        %s780 = scalar_lea.vmem %s1, %s779
        %p781 = pneg %p88
        %p782 = pneg %p85
        %s783 = smul.u32 2, %s41
        %p784 = scmp.lt.s32.totalorder %s783, 3
        %s785 = scalar_select %p784, %s783, 3
        %s786 = smul.addr %s785, 8
        %s787 = scalar_lea.vmem %s2, %s786
        %p788 = pneg %p114
        %p789 = pneg %p111
        %p790 = pneg %p135
        %p791 = pneg %p132
        %p792 = pneg %p156
        %p793 = pneg %p153
        %p794 = pneg %p177
        %p795 = pneg %p174
        %p796 = pneg %p198
        %p797 = pneg %p195
        %p798 = pneg %p219
        %p799 = pneg %p216
        %p800 = pneg %p240
        %p801 = pneg %p237
        %p802 = pneg %p261
        %p803 = pneg %p258
        %p804 = pneg %p282
        %p805 = pneg %p279
        %p806 = pneg %p303
        %p807 = pneg %p300
        %p808 = pneg %p324
        %p809 = pneg %p321
        %p810 = pneg %p345
        %p811 = pneg %p342
        %p812 = pneg %p366
        %p813 = pneg %p363
        %p814 = pneg %p387
        %p815 = pneg %p384
        %p816 = pneg %p408
        %p817 = pneg %p405
        %p818 = pneg %p429
        %p819 = pneg %p426
        %p820 = pneg %p450
        %p821 = pneg %p447
        %p822 = pneg %p471
        %p823 = pneg %p468
        %p824 = pneg %p492
        %p825 = pneg %p489
        %p826 = pneg %p513
        %p827 = pneg %p510
        %p828 = pneg %p534
        %p829 = pneg %p531
        %p830 = pneg %p555
        %p831 = pneg %p552
        %p832 = pneg %p576
        %p833 = pneg %p573
        %p834 = pneg %p597
        %p835 = pneg %p594
        %p836 = pneg %p618
        %p837 = pneg %p615
        %p838 = pneg %p644
        %p839 = pneg %p641
        %s840 = sand.u32 %s631, 1
        %s841 = scalar_lea.sflag [#allocation3], %s840
        %s842 = sand.u32 %s631, 1
        %s843 = smul.addr %s842, 16
        %s844 = scalar_lea.vmem [#allocation2], %s843
        %s845 = smul.u32 2, %s41
        %p846 = scmp.lt.s32.totalorder %s845, 3
        %s847 = scalar_select %p846, %s845, 3
        %s848 = smul.addr %s847, 8
        %s849 = scalar_lea.vmem %s0, %s848
        %s850 = smul.u32 2, %s41
        %s851 = smul.u32 2, %s41
        %p852 = scmp.lt.s32.totalorder %s851, 3
        %s853 = scalar_select %p852, %s851, 3
        %s854 = smul.addr %s853, 8
        %s855 = scalar_lea.vmem %s1, %s854
        %s856 = smul.u32 2, %s41
        %s857 = smul.u32 2, %s41
        %p858 = scmp.lt.s32.totalorder %s857, 3
        %s859 = scalar_select %p858, %s857, 3
        %s860 = smul.addr %s859, 8
        %s861 = scalar_lea.vmem %s2, %s860
        %s862 = smul.u32 2, %s41
        %s863 = smul.u32 2, %s41
        %v864 = vld [vmem:[%s849] sm:$0xff]
        %v865 = vld [vmem:[%s849 + $0x8] sm:$0xff]
        %v866 = vld [vmem:[%s855] sm:$0xff]
        %v867 = vld [vmem:[%s855 + $0x8] sm:$0xff]
        %v868 = vld [vmem:[%s861] sm:$0xff]
        %v869 = vld [vmem:[%s861 + $0x8] sm:$0xff]
        %v870 = vld [vmem:[%s3] sm:$0xf]
        %v871 = vld [vmem:[%s3 + $0x4] sm:$0xf]
        %v872 = vld [vmem:[%s3 + $0x8] sm:$0xf]
        %v873 = vld [vmem:[%s3 + $0xc] sm:$0xf]
        %v874 = vunpack.c.l.bf16 %v870
        %v875 = vunpack.c.l.bf16 %v871
        %v876 = vunpack.c.l.bf16 %v872
        %v877 = vunpack.c.l.bf16 %v873
        %v878 = vld [vmem:[%s4] sm:$0x1]
        %v879 = vunpack.c.l.bf16 %v878
        %v880 = vperm.slane %v879, 0
        %vm881 = vcmask 261120
        %v883 = vsel %vm881, %v866, 0
        %v886 = vsel %vm881, %v867, 0
        %888 = vmatpush.msra.mxu0 0.0
        %889 = vmatpush.msra.mxu0 0.0
        %890 = vmatpush.msra.mxu0 0.0
        %891 = vmatpush.msra.mxu0 0.0
        %892 = vmatpush.msra.mxu0 0.0
        %893 = vmatpush.msra.mxu0 0.0
        %894 = vmatpush.msra.mxu0 0.0
        %895 = vmatpush.msra.mxu0 0.0
        %896 = vmatpush.msra.mxu0 0.0
        %897 = vmatpush.msra.mxu0 0.0
        %898 = vmatpush.msra.mxu0 0.0
        %899 = vmatpush.msra.mxu0 0.0
        %900 = vmatpush.msra.mxu0 %v877
        %901 = vmatpush.msra.mxu0 %v876
        %902 = vmatpush.msra.mxu0 %v875
        %903 = vmatpush.msra.mxu0 %v874
        %904 = vmatmul.f32.gmra.mxu0 %v883
        %v905 = vpop.f32.mrf.mxu0
        %v906 = vadd.f32 %v880, %v905
        %907 = vmatmul.f32.gmra.mxu0 %v886
        %v908 = vpop.f32.mrf.mxu0
        %v909 = vadd.f32 %v880, %v908
        %910 = vdwg.mxu0
        %v911 = vmax.f32 %v906, 0.0
        %v912 = vmax.f32 %v909, 0.0
        %v913 = vld [vmem:[%s5] sm:$0xf]
        %v914 = vld [vmem:[%s5 + $0x4] sm:$0xf]
        %v915 = vld [vmem:[%s5 + $0x8] sm:$0xf]
        %v916 = vld [vmem:[%s5 + $0xc] sm:$0xf]
        %v917 = vld [vmem:[%s5 + $0x10] sm:$0xf]
        %v918 = vld [vmem:[%s5 + $0x14] sm:$0xf]
        %v919 = vld [vmem:[%s5 + $0x18] sm:$0xf]
        %v920 = vld [vmem:[%s5 + $0x1c] sm:$0xf]
        %v921 = vunpack.c.l.bf16 %v913
        %v922 = vunpack.c.l.bf16 %v914
        %v923 = vunpack.c.l.bf16 %v915
        %v924 = vunpack.c.l.bf16 %v916
        %v925 = vunpack.c.l.bf16 %v917
        %v926 = vunpack.c.l.bf16 %v918
        %v927 = vunpack.c.l.bf16 %v919
        %v928 = vunpack.c.l.bf16 %v920
        %v929 = vld [vmem:[%s6] sm:$0x1]
        %v930 = vunpack.c.l.bf16 %v929
        %v931 = vperm.slane %v930, 0
        %vm932 = vcmask 523264
        %v934 = vsel %vm932, %v911, 0
        %v937 = vsel %vm932, %v912, 0
        %939 = vmatpush.msra.mxu0 0.0
        %940 = vmatpush.msra.mxu0 0.0
        %941 = vmatpush.msra.mxu0 0.0
        %942 = vmatpush.msra.mxu0 0.0
        %943 = vmatpush.msra.mxu0 0.0
        %944 = vmatpush.msra.mxu0 0.0
        %945 = vmatpush.msra.mxu0 0.0
        %946 = vmatpush.msra.mxu0 0.0
        %947 = vmatpush.msra.mxu0 %v928
        %948 = vmatpush.msra.mxu0 %v927
        %949 = vmatpush.msra.mxu0 %v926
        %950 = vmatpush.msra.mxu0 %v925
        %951 = vmatpush.msra.mxu0 %v924
        %952 = vmatpush.msra.mxu0 %v923
        %953 = vmatpush.msra.mxu0 %v922
        %954 = vmatpush.msra.mxu0 %v921
        %955 = vmatmul.f32.gmra.mxu0 %v934
        %v956 = vpop.f32.mrf.mxu0
        %v957 = vadd.f32 %v931, %v956
        %958 = vmatmul.f32.gmra.mxu0 %v937
        %v959 = vpop.f32.mrf.mxu0
        %v960 = vadd.f32 %v931, %v959
        %961 = vdwg.mxu0
        %v962 = vmax.f32 %v957, 0.0
        %v963 = vmax.f32 %v960, 0.0
        %v964 = vld [vmem:[%s7] sm:$0xf]
        %v965 = vld [vmem:[%s7 + $0x4] sm:$0xf]
        %v966 = vld [vmem:[%s7 + $0x8] sm:$0xf]
        %v967 = vld [vmem:[%s7 + $0xc] sm:$0xf]
        %v968 = vld [vmem:[%s7 + $0x10] sm:$0xf]
        %v969 = vld [vmem:[%s7 + $0x14] sm:$0xf]
        %v970 = vld [vmem:[%s7 + $0x18] sm:$0xf]
        %v971 = vld [vmem:[%s7 + $0x1c] sm:$0xf]
        %v972 = vunpack.c.l.bf16 %v964
        %v973 = vunpack.c.l.bf16 %v965
        %v974 = vunpack.c.l.bf16 %v966
        %v975 = vunpack.c.l.bf16 %v967
        %v976 = vunpack.c.l.bf16 %v968
        %v977 = vunpack.c.l.bf16 %v969
        %v978 = vunpack.c.l.bf16 %v970
        %v979 = vunpack.c.l.bf16 %v971
        %v980 = vld [vmem:[%s8] sm:$0x1]
        %v981 = vunpack.c.l.bf16 %v980
        %v982 = vperm.slane %v981, 0
        %v984 = vsel %vm932, %v962, 0
        %v987 = vsel %vm932, %v963, 0
        %989 = vmatpush.msra.mxu0 0.0
        %990 = vmatpush.msra.mxu0 0.0
        %991 = vmatpush.msra.mxu0 0.0
        %992 = vmatpush.msra.mxu0 0.0
        %993 = vmatpush.msra.mxu0 0.0
        %994 = vmatpush.msra.mxu0 0.0
        %995 = vmatpush.msra.mxu0 0.0
        %996 = vmatpush.msra.mxu0 0.0
        %997 = vmatpush.msra.mxu0 %v979
        %998 = vmatpush.msra.mxu0 %v978
        %999 = vmatpush.msra.mxu0 %v977
        %1000 = vmatpush.msra.mxu0 %v976
        %1001 = vmatpush.msra.mxu0 %v975
        %1002 = vmatpush.msra.mxu0 %v974
        %1003 = vmatpush.msra.mxu0 %v973
        %1004 = vmatpush.msra.mxu0 %v972
        %1005 = vmatmul.f32.gmra.mxu0 %v984
        %v1006 = vpop.f32.mrf.mxu0
        %v1007 = vadd.f32 %v982, %v1006
        %1008 = vmatmul.f32.gmra.mxu0 %v987
        %v1009 = vpop.f32.mrf.mxu0
        %v1010 = vadd.f32 %v982, %v1009
        %1011 = vdwg.mxu0
        %v1012 = vld [vmem:[%s9] sm:$0xf]
        %v1013 = vld [vmem:[%s9 + $0x4] sm:$0xf]
        %v1014 = vunpack.c.l.bf16 %v1012
        %v1015 = vunpack.c.l.bf16 %v1013
        %v1016 = vld [vmem:[%s10] sm:$0xf]
        %v1017 = vld [vmem:[%s10 + $0x4] sm:$0xf]
        %v1018 = vld [vmem:[%s10 + $0x8] sm:$0xf]
        %v1019 = vld [vmem:[%s10 + $0xc] sm:$0xf]
        %v1020 = vld [vmem:[%s10 + $0x10] sm:$0xf]
        %v1021 = vld [vmem:[%s10 + $0x14] sm:$0xf]
        %v1022 = vld [vmem:[%s10 + $0x18] sm:$0xf]
        %v1023 = vld [vmem:[%s10 + $0x1c] sm:$0xf]
        %v1024 = vld [vmem:[%s10 + $0x20] sm:$0xf]
        %v1025 = vld [vmem:[%s10 + $0x24] sm:$0xf]
        %v1026 = vld [vmem:[%s10 + $0x28] sm:$0xf]
        %v1027 = vld [vmem:[%s10 + $0x2c] sm:$0xf]
        %v1028 = vld [vmem:[%s10 + $0x30] sm:$0xf]
        %v1029 = vld [vmem:[%s10 + $0x34] sm:$0xf]
        %v1030 = vld [vmem:[%s10 + $0x38] sm:$0xf]
        %v1031 = vld [vmem:[%s10 + $0x3c] sm:$0xf]
        %v1032 = vunpack.c.l.bf16 %v1016
        %v1033 = vunpack.c.l.bf16 %v1017
        %v1034 = vunpack.c.l.bf16 %v1018
        %v1035 = vunpack.c.l.bf16 %v1019
        %v1036 = vunpack.c.l.bf16 %v1020
        %v1037 = vunpack.c.l.bf16 %v1021
        %v1038 = vunpack.c.l.bf16 %v1022
        %v1039 = vunpack.c.l.bf16 %v1023
        %v1040 = vunpack.c.l.bf16 %v1024
        %v1041 = vunpack.c.l.bf16 %v1025
        %v1042 = vunpack.c.l.bf16 %v1026
        %v1043 = vunpack.c.l.bf16 %v1027
        %v1044 = vunpack.c.l.bf16 %v1028
        %v1045 = vunpack.c.l.bf16 %v1029
        %v1046 = vunpack.c.l.bf16 %v1030
        %v1047 = vunpack.c.l.bf16 %v1031
        %1048 = vmatpush.msra.mxu0 %v1047
        %1049 = vmatpush.msra.mxu0 %v1046
        %1050 = vmatpush.msra.mxu0 %v1045
        %1051 = vmatpush.msra.mxu0 %v1044
        %1052 = vmatpush.msra.mxu0 %v1043
        %1053 = vmatpush.msra.mxu0 %v1042
        %1054 = vmatpush.msra.mxu0 %v1041
        %1055 = vmatpush.msra.mxu0 %v1040
        %1056 = vmatpush.msra.mxu0 %v1039
        %1057 = vmatpush.msra.mxu0 %v1038
        %1058 = vmatpush.msra.mxu0 %v1037
        %1059 = vmatpush.msra.mxu0 %v1036
        %1060 = vmatpush.msra.mxu0 %v1035
        %1061 = vmatpush.msra.mxu0 %v1034
        %1062 = vmatpush.msra.mxu0 %v1033
        %1063 = vmatpush.msra.mxu0 %v1032
        %1064 = vmatmul.f32.gmra.mxu0 %v1007
        %v1065 = vpop.f32.mrf.mxu0
        %v1066 = vadd.f32 0.0, %v1065
        %1067 = vmatmul.f32.gmra.mxu0 %v1010
        %v1068 = vpop.f32.mrf.mxu0
        %v1069 = vadd.f32 0.0, %v1068
        %1070 = vdwg.mxu0
        %vm1071 = vcmask 130048
        %v1073 = vsel %vm1071, %v864, 0
        %v1076 = vsel %vm1071, %v865, 0
        %1078 = vmatpush.msra.mxu0 0.0
        %1079 = vmatpush.msra.mxu0 0.0
        %1080 = vmatpush.msra.mxu0 0.0
        %1081 = vmatpush.msra.mxu0 0.0
        %1082 = vmatpush.msra.mxu0 0.0
        %1083 = vmatpush.msra.mxu0 0.0
        %1084 = vmatpush.msra.mxu0 0.0
        %1085 = vmatpush.msra.mxu0 0.0
        %1086 = vmatpush.msra.mxu0 0.0
        %1087 = vmatpush.msra.mxu0 0.0
        %1088 = vmatpush.msra.mxu0 0.0
        %1089 = vmatpush.msra.mxu0 0.0
        %1090 = vmatpush.msra.mxu0 0.0
        %1091 = vmatpush.msra.mxu0 0.0
        %1092 = vmatpush.msra.mxu0 %v1015
        %1093 = vmatpush.msra.mxu0 %v1014
        %1094 = vmatmul.f32.gmra.mxu0 %v1073
        %v1095 = vpop.f32.mrf.mxu0
        %v1096 = vadd.f32 %v1066, %v1095
        %1097 = vmatmul.f32.gmra.mxu0 %v1076
        %v1098 = vpop.f32.mrf.mxu0
        %v1099 = vadd.f32 %v1069, %v1098
        %1100 = vdwg.mxu0
        %v1101 = vld [vmem:[%s11] sm:$0x1]
        %v1102 = vunpack.c.l.bf16 %v1101
        %v1103 = vperm.slane %v1102, 0
        %v1104 = vadd.f32 %v1096, %v1103
        %v1105 = vadd.f32 %v1099, %v1103
        %v1106 = vmax.f32 %v1104, 0.0
        %v1107 = vmax.f32 %v1105, 0.0
        %v1108 = vld [vmem:[%s12] sm:$0xf]
        %v1109 = vld [vmem:[%s12 + $0x4] sm:$0xf]
        %v1110 = vld [vmem:[%s12 + $0x8] sm:$0xf]
        %v1111 = vld [vmem:[%s12 + $0xc] sm:$0xf]
        %v1112 = vunpack.c.l.bf16 %v1108
        %v1113 = vunpack.c.l.bf16 %v1109
        %v1114 = vunpack.c.l.bf16 %v1110
        %v1115 = vunpack.c.l.bf16 %v1111
        %v1116 = vld [vmem:[%s13] sm:$0x1]
        %v1117 = vunpack.c.l.bf16 %v1116
        %v1118 = vperm.slane %v1117, 0
        %v1120 = vsel %vm881, %v1106, 0
        %v1123 = vsel %vm881, %v1107, 0
        %1125 = vmatpush.msra.mxu0 0.0
        %1126 = vmatpush.msra.mxu0 0.0
        %1127 = vmatpush.msra.mxu0 0.0
        %1128 = vmatpush.msra.mxu0 0.0
        %1129 = vmatpush.msra.mxu0 0.0
        %1130 = vmatpush.msra.mxu0 0.0
        %1131 = vmatpush.msra.mxu0 0.0
        %1132 = vmatpush.msra.mxu0 0.0
        %1133 = vmatpush.msra.mxu0 0.0
        %1134 = vmatpush.msra.mxu0 0.0
        %1135 = vmatpush.msra.mxu0 0.0
        %1136 = vmatpush.msra.mxu0 0.0
        %1137 = vmatpush.msra.mxu0 %v1115
        %1138 = vmatpush.msra.mxu0 %v1114
        %1139 = vmatpush.msra.mxu0 %v1113
        %1140 = vmatpush.msra.mxu0 %v1112
        %1141 = vmatmul.f32.gmra.mxu0 %v1120
        %v1142 = vpop.f32.mrf.mxu0
        %v1143 = vadd.f32 %v1118, %v1142
        %1144 = vmatmul.f32.gmra.mxu0 %v1123
        %v1145 = vpop.f32.mrf.mxu0
        %v1146 = vadd.f32 %v1118, %v1145
        %1147 = vdwg.mxu0
        %v1148 = vmax.f32 %v1143, 0.0
        %v1149 = vmax.f32 %v1146, 0.0
        %v1150 = vld [vmem:[%s14] sm:$0xf]
        %v1151 = vld [vmem:[%s14 + $0x4] sm:$0xf]
        %v1152 = vld [vmem:[%s14 + $0x8] sm:$0xf]
        %v1153 = vld [vmem:[%s14 + $0xc] sm:$0xf]
        %v1154 = vunpack.c.l.bf16 %v1150
        %v1155 = vunpack.c.l.bf16 %v1151
        %v1156 = vunpack.c.l.bf16 %v1152
        %v1157 = vunpack.c.l.bf16 %v1153
        %v1158 = vld [vmem:[%s15] sm:$0x1]
        %v1159 = vunpack.c.l.bf16 %v1158
        %v1160 = vperm.slane %v1159, 0
        %v1162 = vsel %vm881, %v1148, 0
        %v1165 = vsel %vm881, %v1149, 0
        %1167 = vmatpush.msra.mxu0 0.0
        %1168 = vmatpush.msra.mxu0 0.0
        %1169 = vmatpush.msra.mxu0 0.0
        %1170 = vmatpush.msra.mxu0 0.0
        %1171 = vmatpush.msra.mxu0 0.0
        %1172 = vmatpush.msra.mxu0 0.0
        %1173 = vmatpush.msra.mxu0 0.0
        %1174 = vmatpush.msra.mxu0 0.0
        %1175 = vmatpush.msra.mxu0 0.0
        %1176 = vmatpush.msra.mxu0 0.0
        %1177 = vmatpush.msra.mxu0 0.0
        %1178 = vmatpush.msra.mxu0 0.0
        %1179 = vmatpush.msra.mxu0 %v1157
        %1180 = vmatpush.msra.mxu0 %v1156
        %1181 = vmatpush.msra.mxu0 %v1155
        %1182 = vmatpush.msra.mxu0 %v1154
        %1183 = vmatmul.f32.gmra.mxu0 %v1162
        %v1184 = vpop.f32.mrf.mxu0
        %v1185 = vadd.f32 %v1160, %v1184
        %1186 = vmatmul.f32.gmra.mxu0 %v1165
        %v1187 = vpop.f32.mrf.mxu0
        %v1188 = vadd.f32 %v1160, %v1187
        %1189 = vdwg.mxu0
        %v1190 = vld [vmem:[%s16] sm:$0xf]
        %v1191 = vld [vmem:[%s16 + $0x4] sm:$0xf]
        %v1192 = vunpack.c.l.bf16 %v1190
        %v1193 = vunpack.c.l.bf16 %v1191
        %v1194 = vld [vmem:[%s17] sm:$0x1]
        %v1195 = vunpack.c.l.bf16 %v1194
        %v1196 = vperm.slane %v1195, 0
        %v1198 = vsel %vm1071, %v1185, 0
        %v1201 = vsel %vm1071, %v1188, 0
        %1203 = vmatpush.msra.mxu0 0.0
        %1204 = vmatpush.msra.mxu0 0.0
        %1205 = vmatpush.msra.mxu0 0.0
        %1206 = vmatpush.msra.mxu0 0.0
        %1207 = vmatpush.msra.mxu0 0.0
        %1208 = vmatpush.msra.mxu0 0.0
        %1209 = vmatpush.msra.mxu0 0.0
        %1210 = vmatpush.msra.mxu0 0.0
        %1211 = vmatpush.msra.mxu0 0.0
        %1212 = vmatpush.msra.mxu0 0.0
        %1213 = vmatpush.msra.mxu0 0.0
        %1214 = vmatpush.msra.mxu0 0.0
        %1215 = vmatpush.msra.mxu0 0.0
        %1216 = vmatpush.msra.mxu0 0.0
        %1217 = vmatpush.msra.mxu0 %v1193
        %1218 = vmatpush.msra.mxu0 %v1192
        %1219 = vmatmul.f32.gmra.mxu0 %v1198
        %v1220 = vpop.f32.mrf.mxu0
        %v1221 = vadd.f32 %v1196, %v1220
        %1222 = vmatmul.f32.gmra.mxu0 %v1201
        %v1223 = vpop.f32.mrf.mxu0
        %v1224 = vadd.f32 %v1196, %v1223
        %1225 = vdwg.mxu0
        %v1226 = vmul.f32 %v1221, 0.5
        %v1227 = vmul.f32 %v1224, 0.5
        %v1228 = vmul.f32 %v1226, 1.442695
        %v1229 = vpow.pop %v1228
        %v1230 = vmul.f32 %v1227, 1.442695
        %v1231 = vpow.pop %v1230
        %1234 = vrot.lane.b32.xlu0 %v1229, 120
        %v1235 = vpop.permute.xlu0 %1234
        %1236 = vrot.lane.b32.xlu0 %v1231, 120
        %v1237 = vpop.permute.xlu0 %1236
        %v1240 = vmul.f32 %v868, %v1235
        %v1241 = vmul.f32 %v869, %v1237
        %v1242 = vadd.f32 %v1221, %v1240
        %v1243 = vadd.f32 %v1224, %v1241
        %v1244 = vld [vmem:[%s18] sm:$0xf]
        %v1245 = vunpack.c.l.bf16 %v1244
        %v1246 = vld [vmem:[%s19] sm:$0xf]
        %v1247 = vld [vmem:[%s19 + $0x4] sm:$0xf]
        %v1248 = vld [vmem:[%s19 + $0x8] sm:$0xf]
        %v1249 = vld [vmem:[%s19 + $0xc] sm:$0xf]
        %v1250 = vld [vmem:[%s19 + $0x10] sm:$0xf]
        %v1251 = vld [vmem:[%s19 + $0x14] sm:$0xf]
        %v1252 = vld [vmem:[%s19 + $0x18] sm:$0xf]
        %v1253 = vld [vmem:[%s19 + $0x1c] sm:$0xf]
        %v1254 = vld [vmem:[%s19 + $0x20] sm:$0xf]
        %v1255 = vld [vmem:[%s19 + $0x24] sm:$0xf]
        %v1256 = vld [vmem:[%s19 + $0x28] sm:$0xf]
        %v1257 = vld [vmem:[%s19 + $0x2c] sm:$0xf]
        %v1258 = vld [vmem:[%s19 + $0x30] sm:$0xf]
        %v1259 = vld [vmem:[%s19 + $0x34] sm:$0xf]
        %v1260 = vld [vmem:[%s19 + $0x38] sm:$0xf]
        %v1261 = vld [vmem:[%s19 + $0x3c] sm:$0xf]
        %v1262 = vunpack.c.l.bf16 %v1246
        %v1263 = vunpack.c.l.bf16 %v1247
        %v1264 = vunpack.c.l.bf16 %v1248
        %v1265 = vunpack.c.l.bf16 %v1249
        %v1266 = vunpack.c.l.bf16 %v1250
        %v1267 = vunpack.c.l.bf16 %v1251
        %v1268 = vunpack.c.l.bf16 %v1252
        %v1269 = vunpack.c.l.bf16 %v1253
        %v1270 = vunpack.c.l.bf16 %v1254
        %v1271 = vunpack.c.l.bf16 %v1255
        %v1272 = vunpack.c.l.bf16 %v1256
        %v1273 = vunpack.c.l.bf16 %v1257
        %v1274 = vunpack.c.l.bf16 %v1258
        %v1275 = vunpack.c.l.bf16 %v1259
        %v1276 = vunpack.c.l.bf16 %v1260
        %v1277 = vunpack.c.l.bf16 %v1261
        %1278 = vmatpush.msra.mxu0 %v1277
        %1279 = vmatpush.msra.mxu0 %v1276
        %1280 = vmatpush.msra.mxu0 %v1275
        %1281 = vmatpush.msra.mxu0 %v1274
        %1282 = vmatpush.msra.mxu0 %v1273
        %1283 = vmatpush.msra.mxu0 %v1272
        %1284 = vmatpush.msra.mxu0 %v1271
        %1285 = vmatpush.msra.mxu0 %v1270
        %1286 = vmatpush.msra.mxu0 %v1269
        %1287 = vmatpush.msra.mxu0 %v1268
        %1288 = vmatpush.msra.mxu0 %v1267
        %1289 = vmatpush.msra.mxu0 %v1266
        %1290 = vmatpush.msra.mxu0 %v1265
        %1291 = vmatpush.msra.mxu0 %v1264
        %1292 = vmatpush.msra.mxu0 %v1263
        %1293 = vmatpush.msra.mxu0 %v1262
        %1294 = vmatmul.f32.gmra.mxu0 %v1007
        %v1295 = vpop.f32.mrf.mxu0
        %v1296 = vadd.f32 0.0, %v1295
        %1297 = vmatmul.f32.gmra.mxu0 %v1010
        %v1298 = vpop.f32.mrf.mxu0
        %v1299 = vadd.f32 0.0, %v1298
        %1300 = vdwg.mxu0
        %vm1301 = vcmask 64512
        %v1303 = vsel %vm1301, %v1242, 0
        %v1306 = vsel %vm1301, %v1243, 0
        %1308 = vmatpush.msra.mxu0 0.0
        %1309 = vmatpush.msra.mxu0 0.0
        %1310 = vmatpush.msra.mxu0 0.0
        %1311 = vmatpush.msra.mxu0 0.0
        %1312 = vmatpush.msra.mxu0 0.0
        %1313 = vmatpush.msra.mxu0 0.0
        %1314 = vmatpush.msra.mxu0 0.0
        %1315 = vmatpush.msra.mxu0 0.0
        %1316 = vmatpush.msra.mxu0 0.0
        %1317 = vmatpush.msra.mxu0 0.0
        %1318 = vmatpush.msra.mxu0 0.0
        %1319 = vmatpush.msra.mxu0 0.0
        %1320 = vmatpush.msra.mxu0 0.0
        %1321 = vmatpush.msra.mxu0 0.0
        %1322 = vmatpush.msra.mxu0 0.0
        %1323 = vmatpush.msra.mxu0 %v1245
        %1324 = vmatmul.f32.gmra.mxu0 %v1303
        %v1325 = vpop.f32.mrf.mxu0
        %v1326 = vadd.f32 %v1296, %v1325
        %1327 = vmatmul.f32.gmra.mxu0 %v1306
        %v1328 = vpop.f32.mrf.mxu0
        %v1329 = vadd.f32 %v1299, %v1328
        %1330 = vdwg.mxu0
        %v1331 = vld [vmem:[%s20] sm:$0x1]
        %v1332 = vunpack.c.l.bf16 %v1331
        %v1333 = vperm.slane %v1332, 0
        %v1334 = vadd.f32 %v1326, %v1333
        %v1335 = vadd.f32 %v1329, %v1333
        %v1336 = vmax.f32 %v1334, 0.0
        %v1337 = vmax.f32 %v1335, 0.0
        %v1338 = vld [vmem:[%s21] sm:$0xf]
        %v1339 = vld [vmem:[%s21 + $0x4] sm:$0xf]
        %v1340 = vld [vmem:[%s21 + $0x8] sm:$0xf]
        %v1341 = vld [vmem:[%s21 + $0xc] sm:$0xf]
        %v1342 = vunpack.c.l.bf16 %v1338
        %v1343 = vunpack.c.l.bf16 %v1339
        %v1344 = vunpack.c.l.bf16 %v1340
        %v1345 = vunpack.c.l.bf16 %v1341
        %v1346 = vld [vmem:[%s22] sm:$0x1]
        %v1347 = vunpack.c.l.bf16 %v1346
        %v1348 = vperm.slane %v1347, 0
        %v1350 = vsel %vm881, %v1336, 0
        %v1353 = vsel %vm881, %v1337, 0
        %1355 = vmatpush.msra.mxu0 0.0
        %1356 = vmatpush.msra.mxu0 0.0
        %1357 = vmatpush.msra.mxu0 0.0
        %1358 = vmatpush.msra.mxu0 0.0
        %1359 = vmatpush.msra.mxu0 0.0
        %1360 = vmatpush.msra.mxu0 0.0
        %1361 = vmatpush.msra.mxu0 0.0
        %1362 = vmatpush.msra.mxu0 0.0
        %1363 = vmatpush.msra.mxu0 0.0
        %1364 = vmatpush.msra.mxu0 0.0
        %1365 = vmatpush.msra.mxu0 0.0
        %1366 = vmatpush.msra.mxu0 0.0
        %1367 = vmatpush.msra.mxu0 %v1345
        %1368 = vmatpush.msra.mxu0 %v1344
        %1369 = vmatpush.msra.mxu0 %v1343
        %1370 = vmatpush.msra.mxu0 %v1342
        %1371 = vmatmul.f32.gmra.mxu0 %v1350
        %v1372 = vpop.f32.mrf.mxu0
        %v1373 = vadd.f32 %v1348, %v1372
        %1374 = vmatmul.f32.gmra.mxu0 %v1353
        %v1375 = vpop.f32.mrf.mxu0
        %v1376 = vadd.f32 %v1348, %v1375
        %1377 = vdwg.mxu0
        %v1378 = vmax.f32 %v1373, 0.0
        %v1379 = vmax.f32 %v1376, 0.0
        %v1380 = vld [vmem:[%s23] sm:$0xf]
        %v1381 = vld [vmem:[%s23 + $0x4] sm:$0xf]
        %v1382 = vld [vmem:[%s23 + $0x8] sm:$0xf]
        %v1383 = vld [vmem:[%s23 + $0xc] sm:$0xf]
        %v1384 = vunpack.c.l.bf16 %v1380
        %v1385 = vunpack.c.l.bf16 %v1381
        %v1386 = vunpack.c.l.bf16 %v1382
        %v1387 = vunpack.c.l.bf16 %v1383
        %v1388 = vld [vmem:[%s24] sm:$0x1]
        %v1389 = vunpack.c.l.bf16 %v1388
        %v1390 = vperm.slane %v1389, 0
        %v1392 = vsel %vm881, %v1378, 0
        %v1395 = vsel %vm881, %v1379, 0
        %1397 = vmatpush.msra.mxu0 0.0
        %1398 = vmatpush.msra.mxu0 0.0
        %1399 = vmatpush.msra.mxu0 0.0
        %1400 = vmatpush.msra.mxu0 0.0
        %1401 = vmatpush.msra.mxu0 0.0
        %1402 = vmatpush.msra.mxu0 0.0
        %1403 = vmatpush.msra.mxu0 0.0
        %1404 = vmatpush.msra.mxu0 0.0
        %1405 = vmatpush.msra.mxu0 0.0
        %1406 = vmatpush.msra.mxu0 0.0
        %1407 = vmatpush.msra.mxu0 0.0
        %1408 = vmatpush.msra.mxu0 0.0
        %1409 = vmatpush.msra.mxu0 %v1387
        %1410 = vmatpush.msra.mxu0 %v1386
        %1411 = vmatpush.msra.mxu0 %v1385
        %1412 = vmatpush.msra.mxu0 %v1384
        %1413 = vmatmul.f32.gmra.mxu0 %v1392
        %v1414 = vpop.f32.mrf.mxu0
        %v1415 = vadd.f32 %v1390, %v1414
        %1416 = vmatmul.f32.gmra.mxu0 %v1395
        %v1417 = vpop.f32.mrf.mxu0
        %v1418 = vadd.f32 %v1390, %v1417
        %1419 = vdwg.mxu0
        %v1420 = vmax.f32 %v1415, 0.0
        %v1421 = vmax.f32 %v1418, 0.0
        %v1422 = vld [vmem:[%s25] sm:$0xf]
        %v1423 = vld [vmem:[%s25 + $0x4] sm:$0xf]
        %v1424 = vunpack.c.l.bf16 %v1422
        %v1425 = vunpack.c.l.bf16 %v1423
        %v1426 = vld [vmem:[%s26] sm:$0x1]
        %v1427 = vunpack.c.l.bf16 %v1426
        %v1428 = vperm.slane %v1427, 0
        %v1430 = vsel %vm1071, %v1420, 0
        %v1433 = vsel %vm1071, %v1421, 0
        %1435 = vmatpush.msra.mxu0 0.0
        %1436 = vmatpush.msra.mxu0 0.0
        %1437 = vmatpush.msra.mxu0 0.0
        %1438 = vmatpush.msra.mxu0 0.0
        %1439 = vmatpush.msra.mxu0 0.0
        %1440 = vmatpush.msra.mxu0 0.0
        %1441 = vmatpush.msra.mxu0 0.0
        %1442 = vmatpush.msra.mxu0 0.0
        %1443 = vmatpush.msra.mxu0 0.0
        %1444 = vmatpush.msra.mxu0 0.0
        %1445 = vmatpush.msra.mxu0 0.0
        %1446 = vmatpush.msra.mxu0 0.0
        %1447 = vmatpush.msra.mxu0 0.0
        %1448 = vmatpush.msra.mxu0 0.0
        %1449 = vmatpush.msra.mxu0 %v1425
        %1450 = vmatpush.msra.mxu0 %v1424
        %1451 = vmatmul.f32.gmra.mxu0 %v1430
        %v1452 = vpop.f32.mrf.mxu0
        %v1453 = vadd.f32 %v1428, %v1452
        %1454 = vmatmul.f32.gmra.mxu0 %v1433
        %v1455 = vpop.f32.mrf.mxu0
        %v1456 = vadd.f32 %v1428, %v1455
        %1457 = vdwg.mxu0
        %1460 = vrot.lane.b32.xlu0 %v1221, 16
        %v1461 = vpop.permute.xlu0 %1460
        %1462 = vrot.lane.b32.xlu0 %v1224, 16
        %v1463 = vpop.permute.xlu0 %1462
        %v1466 = vsel %vm1071, %v1453, %v1461
        %v1467 = vsel %vm1071, %v1456, %v1463
        %1468 = vst.msk [vmem:[%s844] sm:$0xff] %vm881, %v1466
        %1469 = vst.msk [vmem:[%s844 + $0x8] sm:$0xff] %vm881, %v1467
        %s1470 = sand.u32 %s631, 1
        %s1471 = scalar_lea.sflag [#allocation3], %s1470
        %s1472 = sand.u32 %s631, 1
        %s1473 = smul.addr %s1472, 16
        %s1474 = scalar_lea.vmem [#allocation2], %s1473
        // Predicated region
        $region129: #{tpu_custom_call.1} parent=127 // pred_check
          %p1475 = pneg %p641
        $region130: #{tpu_custom_call.1} parent=127 // pred_check_branch
          %1477 = sbr.rel (%p1475) target = $region132
        $region131: #{tpu_custom_call.1} parent=127 // pred_region
          %s1478 = smul.u32 2, %s41
          %1480 = vsyncadd %s1471, 0
          %s1481 = smul.addr %s1478, 8
          %s1482 = scalar_lea.hbm %s27, %s1481
          %s1483 = sshll.u32 %s1474, 4
          %s1484 = int_to_ptr.vmem [resolvable:$true] %s1483
          %s1485 = sshll.u32 %s1482, 4
          %s1486 = int_to_ptr.hbm [resolvable:$true] %s1485
          %1491 = dma.vmem_to_hbm [thread:$0]  %s1484, 256, %s1486, %s1471, 128, 128, 8
        $region132: #{tpu_custom_call.1} parent=127 // pred_fallthru
          _
      $region128: #{tpu_custom_call.1} parent=5 // pred_fallthru
        _
      %p1492 = scmp.le.s32.totalorder 2, %s36
      // Predicated region
      $region133: #{tpu_custom_call.1} parent=5 // pred_check
        %p1493 = pneg %p1492
      $region134: #{tpu_custom_call.1} parent=5 // pred_check_branch
        %1495 = sbr.rel (%p1493) target = $region136
      $region135: #{tpu_custom_call.1} parent=5 // pred_region
        %s1496 = ssub.s32 %s36, 2
        // Predicated region
        $region137: #{tpu_custom_call.1} parent=135 // pred_check
          %p1497 = pneg %p647
        $region138: #{tpu_custom_call.1} parent=135 // pred_check_branch
          %1499 = sbr.rel (%p1497) target = $region140
        $region139: #{tpu_custom_call.1} parent=135 // pred_region
          %s1500 = sand.u32 %s632, 1
          %s1501 = scalar_lea.sflag [#allocation3], %s1500
          %s1502 = sand.u32 %s632, 1
          %s1503 = smul.addr %s1502, 16
          %s1504 = scalar_lea.vmem [#allocation2], %s1503
          %1506 = dma.done %s1501, 256
        $region140: #{tpu_custom_call.1} parent=135 // pred_fallthru
          _
      $region136: #{tpu_custom_call.1} parent=5 // pred_fallthru
        _
    $region6: #{tpu_custom_call.1} parent=1 // loop_footer
      %s40 = sadd.s32 1, %s36
    $region7: #{tpu_custom_call.1} parent=1 // loop_footer_branch
      %35 = sbr.rel target = $region3
    $region8: #{tpu_custom_call.1} parent=1 // loop_exit
      _
    %1507 = vsyncpa [#allocation3], 1
    %s1508 = scalar_lea.sflag [#allocation3], 1
    %1509 = vsyncpa %s1508, 1

</llo_original>
